<compile_context>
chip_gen: v7x
topology: tpu7x:2x2x1
jax: 0.10.0
libtpu: 0.0.40
codegen_flags: <defaults>
</compile_context>

<pallas_src>
import functools

import jax
import jax.numpy as jnp
from jax import lax
from jax.experimental import pallas as pl
from jax.experimental.pallas import tpu as pltpu

_BN_EPS = 1e-5


# ----------------------------------------------------------------------------
# Kernel: one lane-dense slab of images per grid step; the whole 4-layer chain
# is a single 3x3 conv (9 roll+mask taps) over the ones-augmented input.
# ----------------------------------------------------------------------------
def _fused_conv3x3_kernel(x_ref, mask_ref, w_ref, o_ref, *, W):
    x = x_ref[...]                         # (C_aug, L) f32, L = B_TILE * H * W
    L = x.shape[-1]

    m_w = {-1: mask_ref[0:1, :], 0: None, 1: mask_ref[1:2, :]}   # w>0 / w<W-1
    m_h = {-1: mask_ref[2:3, :], 0: None, 1: mask_ref[3:4, :]}   # h>0 / h<H-1

    acc = None
    tap = 0
    for dh in (-1, 0, 1):
        for dw in (-1, 0, 1):
            # rolled[p] = x[p + dh*W + dw]  (jnp.roll semantics)
            shift = (-(dh * W + dw)) % L
            xs = pltpu.roll(x, shift=shift, axis=1) if shift else x
            mask = None
            if m_h[dh] is not None:
                mask = m_h[dh]
            if m_w[dw] is not None:
                mask = m_w[dw] if mask is None else mask * m_w[dw]
            if mask is not None:
                xs = xs * mask             # zero out-of-image taps (exact padding)
            contrib = jnp.dot(w_ref[tap], xs, preferred_element_type=jnp.float32)
            acc = contrib if acc is None else acc + contrib
            tap += 1

    # ReLU intentionally never applied (PyTorch `if bn ... elif activate` quirk).
    o_ref[...] = acc.astype(o_ref.dtype)


# ----------------------------------------------------------------------------
# Wrapper helpers: BN folding, exact affine composition, batch-tile choice.
# ----------------------------------------------------------------------------
def _fold_bn(w_oihw, bias, bn):
    gamma, beta, mean, var = bn
    scale = gamma * lax.rsqrt(var + _BN_EPS)
    return w_oihw * scale[:, None, None, None], beta + (bias - mean) * scale


def _compose_taps(params):
    """Compose the four BN-folded affine conv layers into the 9 tap matrices of
    an equivalent 3x3 conv over the ones-augmented input (exact, all f32)."""
    w1, b1 = _fold_bn(*params["l1"])       # (mid, Cin, 1, 1)
    w2, b2 = _fold_bn(*params["l2"])       # (mid, mid, 1, 3)
    w3, b3 = _fold_bn(*params["l3"])       # (mid, mid, 3, 1)
    w4, b4 = _fold_bn(*params["l4"])       # (Cout, mid, 1, 1)
    mid, cin = w1.shape[0], w1.shape[1]
    f32 = jnp.float32

    # Augmented maps act on [features; 1]; the ones row passes through only on
    # the centre tap, so zero padding of the ones channel carries the bias
    # propagation across borders exactly.
    a1_top = jnp.concatenate([w1[:, :, 0, 0], b1[:, None]], axis=1)
    a1_bot = jnp.concatenate([jnp.zeros((1, cin), f32), jnp.ones((1, 1), f32)], axis=1)
    a1 = jnp.concatenate([a1_top, a1_bot], axis=0)                 # (mid+1, cin+1)

    def aug(w_slice, b, centre):
        top = jnp.concatenate(
            [w_slice, b[:, None] if centre else jnp.zeros((mid, 1), f32)], axis=1)
        bot = jnp.concatenate(
            [jnp.zeros((1, mid), f32),
             jnp.ones((1, 1), f32) if centre else jnp.zeros((1, 1), f32)], axis=1)
        return jnp.concatenate([top, bot], axis=0)                  # (mid+1, mid+1)

    a2 = [aug(w2[:, :, 0, k], b2, k == 1) for k in range(3)]        # dw = k - 1
    a3 = [aug(w3[:, :, k, 0], b3, k == 1) for k in range(3)]        # dh = k - 1
    a4 = jnp.concatenate([w4[:, :, 0, 0], b4[:, None]], axis=1)     # (Cout, mid+1)

    taps = [a4 @ a3[kh] @ a2[kw] @ a1 for kh in range(3) for kw in range(3)]
    return jnp.stack(taps, axis=0).astype(f32)                      # (9, Cout, cin+1)


def _pick_batch_tile(n, m):
    """Largest per-step image count with a 128-aligned lane slab <= 4K lanes,
    preferring >= 2 grid steps (v7x has two TensorCores)."""
    divisors = [bt for bt in range(1, n + 1) if n % bt == 0]
    valid = [bt for bt in divisors if (bt * m) % 128 == 0 or bt == n]
    multi = [bt for bt in valid if n // bt >= 2]
    pool = multi if multi else valid
    wide = [bt for bt in pool if bt * m <= 4096]
    return max(wide) if wide else min(pool)


# ----------------------------------------------------------------------------
# Forward pass
# ----------------------------------------------------------------------------
def small_bais_conv_forward(x_nchw, params):
    n, c_in, h, w = x_nchw.shape
    m = h * w
    c_aug = c_in + 1

    w_taps = _compose_taps(params)                        # (9, Cout, c_aug) f32
    c_out = w_taps.shape[1]

    b_tile = _pick_batch_tile(n, m)
    lanes = b_tile * m
    grid = (n // b_tile,)

    # Channel-major lane-dense activation slab (Cin+1, N*H*W), ones channel last.
    x_f32 = x_nchw.reshape(n, c_in, m).astype(jnp.float32)
    x_aug = jnp.concatenate([x_f32, jnp.ones((n, 1, m), jnp.float32)], axis=1)
    x_cm = jnp.transpose(x_aug, (1, 0, 2)).reshape(c_aug, n * m)

    # Boundary masks (periodic per image) -> one constant (4, lanes) input.
    wpos = jnp.arange(m, dtype=jnp.int32) % w
    hpos = jnp.arange(m, dtype=jnp.int32) // w
    mask_m = jnp.stack([wpos > 0, wpos < w - 1, hpos > 0, hpos < h - 1],
                       axis=0).astype(jnp.float32)        # (4, M)
    masks = jnp.tile(mask_m, (1, b_tile))                 # (4, lanes)

    out_cm = pl.pallas_call(
        functools.partial(_fused_conv3x3_kernel, W=w),
        out_shape=jax.ShapeDtypeStruct((c_out, n * m), jnp.float32),
        grid=grid,
        in_specs=[
            pl.BlockSpec((c_aug, lanes), lambda i: (0, i)),        # image slab
            pl.BlockSpec((4, lanes), lambda i: (0, 0)),            # boundary masks
            pl.BlockSpec((9, c_out, c_aug), lambda i: (0, 0, 0)),  # composed taps
        ],
        out_specs=pl.BlockSpec((c_out, lanes), lambda i: (0, i)),
        compiler_params=pltpu.CompilerParams(
            dimension_semantics=("parallel",),    # image slabs split across TCs (v7x)
        ),
    )(x_cm, masks, w_taps)

    out = out_cm.reshape(c_out, n, m)
    return jnp.transpose(out, (1, 0, 2)).reshape(n, c_out, h, w)


small_bais_conv = jax.jit(small_bais_conv_forward)


# ----------------------------------------------------------------------------
# Plain-JAX f32 reference (conv + bias + inference BatchNorm), for validation.
# ----------------------------------------------------------------------------
def _reference_forward(x_nchw, params):
    def conv_bn(x, wt, b, bn, pad):
        gamma, beta, mean, var = bn
        y = lax.conv_general_dilated(
            x, wt, window_strides=(1, 1), padding=pad,
            dimension_numbers=("NCHW", "OIHW", "NCHW"))
        y = y + b[None, :, None, None]
        inv = gamma * lax.rsqrt(var + _BN_EPS)
        return ((y - mean[None, :, None, None]) * inv[None, :, None, None]
                + beta[None, :, None, None])

    x = conv_bn(x_nchw, *params["l1"], pad=[(0, 0), (0, 0)])
    x = conv_bn(x, *params["l2"], pad=[(0, 0), (1, 1)])
    x = conv_bn(x, *params["l3"], pad=[(1, 1), (0, 0)])
    x = conv_bn(x, *params["l4"], pad=[(0, 0), (0, 0)])
    return x


# ----------------------------------------------------------------------------
# Parameter construction (deterministic, matching nn.Module shapes)
# ----------------------------------------------------------------------------
def _make_conv_bn_params(key, c_in, c_out, kh, kw):
    kw_, kb_, kg_, kbt_, km_, kv_ = jax.random.split(key, 6)
    weight = jax.random.normal(kw_, (c_out, c_in, kh, kw), jnp.float32) * 0.1
    bias = jax.random.normal(kb_, (c_out,), jnp.float32) * 0.1
    gamma = 1.0 + 0.1 * jax.random.normal(kg_, (c_out,), jnp.float32)
    beta = 0.1 * jax.random.normal(kbt_, (c_out,), jnp.float32)
    run_mean = 0.1 * jax.random.normal(km_, (c_out,), jnp.float32)
    run_var = jnp.abs(1.0 + 0.1 * jax.random.normal(kv_, (c_out,), jnp.float32))
    return weight, bias, (gamma, beta, run_mean, run_var)


def make_small_bais_conv_params(key, in_put, out_put):
    mid = out_put // 4
    k1, k2, k3, k4 = jax.random.split(key, 4)
    return {
        "l1": _make_conv_bn_params(k1, in_put, mid, 1, 1),
        "l2": _make_conv_bn_params(k2, mid, mid, 1, 3),
        "l3": _make_conv_bn_params(k3, mid, mid, 3, 1),
        "l4": _make_conv_bn_params(k4, mid, out_put, 1, 1),
    }


if __name__ == "__main__":
    key = jax.random.PRNGKey(0)
    kx, kp = jax.random.split(key)

    in_put, out_put = 4, 32
    x = jax.random.normal(kx, (2, in_put, 16, 16), jnp.float32)   # NCHW

    params = make_small_bais_conv_params(kp, in_put, out_put)
    out = small_bais_conv(x, params)
    jax.block_until_ready(out)
    assert out.shape == (2, out_put, 16, 16), out.shape

    # Kernel is f32 end-to-end; tolerance covers MXU f32 pass differences.
    ref = _reference_forward(x, params)
    assert jnp.allclose(out, ref, atol=2e-2, rtol=2e-2), \
        float(jnp.max(jnp.abs(out - ref)))

    print("KERNEL_OK")
</pallas_src>

<mosaic_0001>
module attributes {stable_mosaic.version = 11 : i64} {
  func.func @_fused_conv3x3_kernel(%arg0: i32, %arg1: memref<5x256xf32, #tpu.memory_space<vmem>>, %arg2: memref<4x256xf32, #tpu.memory_space<vmem>>, %arg3: memref<9x32x5xf32, #tpu.memory_space<vmem>>, %arg4: memref<32x256xf32, #tpu.memory_space<vmem>>) attributes {dimension_semantics = [#tpu.dimension_semantics<parallel>], iteration_bounds = array<i64: 2>, scalar_prefetch = 0 : i64, scratch_operands = 0 : i64, tpu.core_type = #tpu.core_type<tc>, window_params = [{transform_indices = @transform_0, window_bounds = array<i64: 5, 256>}, {pipeline_mode = #tpu.pipeline_mode<synchronous>, transform_indices = @transform_1, window_bounds = array<i64: 4, 256>}, {pipeline_mode = #tpu.pipeline_mode<synchronous>, transform_indices = @transform_2, window_bounds = array<i64: 9, 32, 5>}, {transform_indices = @transform_3, window_bounds = array<i64: 32, 256>}]} {
    %c0 = arith.constant 0 : index
    %c0_0 = arith.constant 0 : index
    %0 = vector.load %arg1[%c0, %c0_0] : memref<5x256xf32, #tpu.memory_space<vmem>>, vector<5x256xf32>
    %c0_1 = arith.constant 0 : index
    %c0_2 = arith.constant 0 : index
    %1 = vector.load %arg2[%c0_1, %c0_2] : memref<4x256xf32, #tpu.memory_space<vmem>>, vector<1x256xf32>
    %c1 = arith.constant 1 : index
    %c0_3 = arith.constant 0 : index
    %2 = vector.load %arg2[%c1, %c0_3] : memref<4x256xf32, #tpu.memory_space<vmem>>, vector<1x256xf32>
    %c2 = arith.constant 2 : index
    %c0_4 = arith.constant 0 : index
    %3 = vector.load %arg2[%c2, %c0_4] : memref<4x256xf32, #tpu.memory_space<vmem>>, vector<1x256xf32>
    %c3 = arith.constant 3 : index
    %c0_5 = arith.constant 0 : index
    %4 = vector.load %arg2[%c3, %c0_5] : memref<4x256xf32, #tpu.memory_space<vmem>>, vector<1x256xf32>
    %c17_i32 = arith.constant 17 : i32
    %5 = tpu.dynamic_rotate %0 by %c17_i32 dim 1 : vector<5x256xf32>, i32 -> vector<5x256xf32>
    %6 = arith.mulf %3, %1 : vector<1x256xf32>
    %7 = vector.broadcast %6 : vector<1x256xf32> to vector<5x256xf32>
    %8 = arith.mulf %5, %7 : vector<5x256xf32>
    %c0_6 = arith.constant 0 : index
    %c0_7 = arith.constant 0 : index
    %c0_8 = arith.constant 0 : index
    %9 = vector.load %arg3[%c0_6, %c0_7, %c0_8] : memref<9x32x5xf32, #tpu.memory_space<vmem>>, vector<1x32x5xf32>
    %10 = vector.shape_cast %9 : vector<1x32x5xf32> to vector<32x5xf32>
    %cst = arith.constant dense<0.000000e+00> : vector<32x256xf32>
    %11 = tpu.matmul %10, %8, %cst {dimension_numbers = #tpu.dot_dimension_numbers<[1], [0], [0], [1], [0, 0, 1, 1], [], []>} : vector<32x5xf32>, vector<5x256xf32>, vector<32x256xf32> -> vector<32x256xf32>
    %c16_i32 = arith.constant 16 : i32
    %12 = tpu.dynamic_rotate %0 by %c16_i32 dim 1 : vector<5x256xf32>, i32 -> vector<5x256xf32>
    %13 = vector.broadcast %3 : vector<1x256xf32> to vector<5x256xf32>
    %14 = arith.mulf %12, %13 : vector<5x256xf32>
    %c1_9 = arith.constant 1 : index
    %c0_10 = arith.constant 0 : index
    %c0_11 = arith.constant 0 : index
    %15 = vector.load %arg3[%c1_9, %c0_10, %c0_11] : memref<9x32x5xf32, #tpu.memory_space<vmem>>, vector<1x32x5xf32>
    %16 = vector.shape_cast %15 : vector<1x32x5xf32> to vector<32x5xf32>
    %cst_12 = arith.constant dense<0.000000e+00> : vector<32x256xf32>
    %17 = tpu.matmul %16, %14, %cst_12 {dimension_numbers = #tpu.dot_dimension_numbers<[1], [0], [0], [1], [0, 0, 1, 1], [], []>} : vector<32x5xf32>, vector<5x256xf32>, vector<32x256xf32> -> vector<32x256xf32>
    %18 = arith.addf %11, %17 : vector<32x256xf32>
    %c15_i32 = arith.constant 15 : i32
    %19 = tpu.dynamic_rotate %0 by %c15_i32 dim 1 : vector<5x256xf32>, i32 -> vector<5x256xf32>
    %20 = arith.mulf %3, %2 : vector<1x256xf32>
    %21 = vector.broadcast %20 : vector<1x256xf32> to vector<5x256xf32>
    %22 = arith.mulf %19, %21 : vector<5x256xf32>
    %c2_13 = arith.constant 2 : index
    %c0_14 = arith.constant 0 : index
    %c0_15 = arith.constant 0 : index
    %23 = vector.load %arg3[%c2_13, %c0_14, %c0_15] : memref<9x32x5xf32, #tpu.memory_space<vmem>>, vector<1x32x5xf32>
    %24 = vector.shape_cast %23 : vector<1x32x5xf32> to vector<32x5xf32>
    %cst_16 = arith.constant dense<0.000000e+00> : vector<32x256xf32>
    %25 = tpu.matmul %24, %22, %cst_16 {dimension_numbers = #tpu.dot_dimension_numbers<[1], [0], [0], [1], [0, 0, 1, 1], [], []>} : vector<32x5xf32>, vector<5x256xf32>, vector<32x256xf32> -> vector<32x256xf32>
    %26 = arith.addf %18, %25 : vector<32x256xf32>
    %c1_i32 = arith.constant 1 : i32
    %27 = tpu.dynamic_rotate %0 by %c1_i32 dim 1 : vector<5x256xf32>, i32 -> vector<5x256xf32>
    %28 = vector.broadcast %1 : vector<1x256xf32> to vector<5x256xf32>
    %29 = arith.mulf %27, %28 : vector<5x256xf32>
    %c3_17 = arith.constant 3 : index
    %c0_18 = arith.constant 0 : index
    %c0_19 = arith.constant 0 : index
    %30 = vector.load %arg3[%c3_17, %c0_18, %c0_19] : memref<9x32x5xf32, #tpu.memory_space<vmem>>, vector<1x32x5xf32>
    %31 = vector.shape_cast %30 : vector<1x32x5xf32> to vector<32x5xf32>
    %cst_20 = arith.constant dense<0.000000e+00> : vector<32x256xf32>
    %32 = tpu.matmul %31, %29, %cst_20 {dimension_numbers = #tpu.dot_dimension_numbers<[1], [0], [0], [1], [0, 0, 1, 1], [], []>} : vector<32x5xf32>, vector<5x256xf32>, vector<32x256xf32> -> vector<32x256xf32>
    %33 = arith.addf %26, %32 : vector<32x256xf32>
    %c4 = arith.constant 4 : index
    %c0_21 = arith.constant 0 : index
    %c0_22 = arith.constant 0 : index
    %34 = vector.load %arg3[%c4, %c0_21, %c0_22] : memref<9x32x5xf32, #tpu.memory_space<vmem>>, vector<1x32x5xf32>
    %35 = vector.shape_cast %34 : vector<1x32x5xf32> to vector<32x5xf32>
    %cst_23 = arith.constant dense<0.000000e+00> : vector<32x256xf32>
    %36 = tpu.matmul %35, %0, %cst_23 {dimension_numbers = #tpu.dot_dimension_numbers<[1], [0], [0], [1], [0, 0, 1, 1], [], []>} : vector<32x5xf32>, vector<5x256xf32>, vector<32x256xf32> -> vector<32x256xf32>
    %37 = arith.addf %33, %36 : vector<32x256xf32>
    %c255_i32 = arith.constant 255 : i32
    %38 = tpu.dynamic_rotate %0 by %c255_i32 dim 1 : vector<5x256xf32>, i32 -> vector<5x256xf32>
    %39 = vector.broadcast %2 : vector<1x256xf32> to vector<5x256xf32>
    %40 = arith.mulf %38, %39 : vector<5x256xf32>
    %c5 = arith.constant 5 : index
    %c0_24 = arith.constant 0 : index
    %c0_25 = arith.constant 0 : index
    %41 = vector.load %arg3[%c5, %c0_24, %c0_25] : memref<9x32x5xf32, #tpu.memory_space<vmem>>, vector<1x32x5xf32>
    %42 = vector.shape_cast %41 : vector<1x32x5xf32> to vector<32x5xf32>
    %cst_26 = arith.constant dense<0.000000e+00> : vector<32x256xf32>
    %43 = tpu.matmul %42, %40, %cst_26 {dimension_numbers = #tpu.dot_dimension_numbers<[1], [0], [0], [1], [0, 0, 1, 1], [], []>} : vector<32x5xf32>, vector<5x256xf32>, vector<32x256xf32> -> vector<32x256xf32>
    %44 = arith.addf %37, %43 : vector<32x256xf32>
    %c241_i32 = arith.constant 241 : i32
    %45 = tpu.dynamic_rotate %0 by %c241_i32 dim 1 : vector<5x256xf32>, i32 -> vector<5x256xf32>
    %46 = arith.mulf %4, %1 : vector<1x256xf32>
    %47 = vector.broadcast %46 : vector<1x256xf32> to vector<5x256xf32>
    %48 = arith.mulf %45, %47 : vector<5x256xf32>
    %c6 = arith.constant 6 : index
    %c0_27 = arith.constant 0 : index
    %c0_28 = arith.constant 0 : index
    %49 = vector.load %arg3[%c6, %c0_27, %c0_28] : memref<9x32x5xf32, #tpu.memory_space<vmem>>, vector<1x32x5xf32>
    %50 = vector.shape_cast %49 : vector<1x32x5xf32> to vector<32x5xf32>
    %cst_29 = arith.constant dense<0.000000e+00> : vector<32x256xf32>
    %51 = tpu.matmul %50, %48, %cst_29 {dimension_numbers = #tpu.dot_dimension_numbers<[1], [0], [0], [1], [0, 0, 1, 1], [], []>} : vector<32x5xf32>, vector<5x256xf32>, vector<32x256xf32> -> vector<32x256xf32>
    %52 = arith.addf %44, %51 : vector<32x256xf32>
    %c240_i32 = arith.constant 240 : i32
    %53 = tpu.dynamic_rotate %0 by %c240_i32 dim 1 : vector<5x256xf32>, i32 -> vector<5x256xf32>
    %54 = vector.broadcast %4 : vector<1x256xf32> to vector<5x256xf32>
    %55 = arith.mulf %53, %54 : vector<5x256xf32>
    %c7 = arith.constant 7 : index
    %c0_30 = arith.constant 0 : index
    %c0_31 = arith.constant 0 : index
    %56 = vector.load %arg3[%c7, %c0_30, %c0_31] : memref<9x32x5xf32, #tpu.memory_space<vmem>>, vector<1x32x5xf32>
    %57 = vector.shape_cast %56 : vector<1x32x5xf32> to vector<32x5xf32>
    %cst_32 = arith.constant dense<0.000000e+00> : vector<32x256xf32>
    %58 = tpu.matmul %57, %55, %cst_32 {dimension_numbers = #tpu.dot_dimension_numbers<[1], [0], [0], [1], [0, 0, 1, 1], [], []>} : vector<32x5xf32>, vector<5x256xf32>, vector<32x256xf32> -> vector<32x256xf32>
    %59 = arith.addf %52, %58 : vector<32x256xf32>
    %c239_i32 = arith.constant 239 : i32
    %60 = tpu.dynamic_rotate %0 by %c239_i32 dim 1 : vector<5x256xf32>, i32 -> vector<5x256xf32>
    %61 = arith.mulf %4, %2 : vector<1x256xf32>
    %62 = vector.broadcast %61 : vector<1x256xf32> to vector<5x256xf32>
    %63 = arith.mulf %60, %62 : vector<5x256xf32>
    %c8 = arith.constant 8 : index
    %c0_33 = arith.constant 0 : index
    %c0_34 = arith.constant 0 : index
    %64 = vector.load %arg3[%c8, %c0_33, %c0_34] : memref<9x32x5xf32, #tpu.memory_space<vmem>>, vector<1x32x5xf32>
    %65 = vector.shape_cast %64 : vector<1x32x5xf32> to vector<32x5xf32>
    %cst_35 = arith.constant dense<0.000000e+00> : vector<32x256xf32>
    %66 = tpu.matmul %65, %63, %cst_35 {dimension_numbers = #tpu.dot_dimension_numbers<[1], [0], [0], [1], [0, 0, 1, 1], [], []>} : vector<32x5xf32>, vector<5x256xf32>, vector<32x256xf32> -> vector<32x256xf32>
    %67 = arith.addf %59, %66 : vector<32x256xf32>
    %c0_36 = arith.constant 0 : index
    %c0_37 = arith.constant 0 : index
    %68 = vector.load %arg4[%c0_36, %c0_37] : memref<32x256xf32, #tpu.memory_space<vmem>>, vector<32x256xf32>
    tpu.vector_store %arg4[%c0_36, %c0_37], %67 {strides = array<i32>} : memref<32x256xf32, #tpu.memory_space<vmem>>, vector<32x256xf32>,
    return
  }
  func.func @transform_0(%arg0: i32) -> (i32, i32) {
    %c0_i32 = arith.constant 0 : i32
    %c0_i32_0 = arith.constant 0 : i32
    return %c0_i32, %arg0 : i32, i32
  }
  func.func @transform_1(%arg0: i32) -> (i32, i32) {
    %c0_i32 = arith.constant 0 : i32
    %c0_i32_0 = arith.constant 0 : i32
    %c0_i32_1 = arith.constant 0 : i32
    return %c0_i32, %c0_i32_0 : i32, i32
  }
  func.func @transform_2(%arg0: i32) -> (i32, i32, i32) {
    %c0_i32 = arith.constant 0 : i32
    %c0_i32_0 = arith.constant 0 : i32
    %c0_i32_1 = arith.constant 0 : i32
    %c0_i32_2 = arith.constant 0 : i32
    return %c0_i32, %c0_i32_0, %c0_i32_1 : i32, i32, i32
  }
  func.func @transform_3(%arg0: i32) -> (i32, i32) {
    %c0_i32 = arith.constant 0 : i32
    %c0_i32_0 = arith.constant 0 : i32
    return %c0_i32, %arg0 : i32, i32
  }
}

</mosaic_0001>

<llo_original>
// kernel: small_bais_conv_forward.1
$region0: #{small_bais_conv_forward.1}
  #allocation0 [shape = 'u32[]', space=smem, size = 0x4, offset = 0x4, fixed_abs, tag = 'smem constant byte address 0x4 - core index']
  #allocation1 [shape = 'u32[144,128]{1,0:T(1,128)}', space=vmem, size = 0x12000, scoped, tag = 'internal scratch']
  %s0 = inlined_call_operand.vmem [shape: f32[5,512], index: 0, kind: input, shape index: {}]
  %s1 = inlined_call_operand.vmem [shape: f32[4,256], index: 1, kind: input, shape index: {}]
  %s2 = inlined_call_operand.vmem [shape: f32[9,32,5], index: 2, kind: input, shape index: {}]
  %s3 = inlined_call_operand.vmem [shape: f32[32,512], index: 3, kind: output, shape index: {}]
  %s4 = sld [smem:[#allocation0]]
  $region64: #{small_bais_conv_forward.1} parent=0
    _
  %s6 = ssub.s32 1, %s4
  %s7 = scalar_select 0, %s6, %s4
  $region1: #{small_bais_conv_forward.1} parent=0
    #allocation2 [shape = 'u8[65536]{0}', space=vmem, size = 0x10000, scoped, tag = 'output window, operand 0']
    loop: start=0, step=1, limit=4
    $region2: #{small_bais_conv_forward.1} parent=1 // loop_pre_header
      _
    $region3: #{small_bais_conv_forward.1} parent=1 // loop_header
      %s9 = sphi 0, %s13
      %p10 = scmp.ge.s32.totalorder %s9, 4
      %s19 = sphi 0, %s21
      %s22 = sphi 0, %s19
      %s23 = sphi 0, %s22
      %s39 = sphi 0, %s23
      %s43 = sphi 0, %s43
      %s45 = sphi 0, %s43
      %s46 = sphi 0, %s45
      %s60 = sphi 0, %s46
      %s64 = sphi 0, %s64
      %s66 = sphi 0, %s64
      %s67 = sphi 0, %s66
      %s81 = sphi 0, %s67
      %s87 = sphi 0, %s89
      %s90 = sphi 0, %s87
      %s91 = sphi 0, %s90
      %s107 = sphi 0, %s91
    $region4: #{small_bais_conv_forward.1} parent=1 // loop_header_branch
      %12 = sbr.rel (%p10) target = $region8
    $region5: #{small_bais_conv_forward.1} parent=1 // loop_body
      %s14 = ssub.s32 %s9, 1
      %s15 = ssub.s32 %s9, 2
      %s16 = sadd.s32 %s9, 1
      %s17 = ssub.s32 %s9, %s16
      %p18 = scmp.eq.s32.totalorder %s17, 0
      %s20 = sadd.s32 %s19, 1
      %s21 = scalar_select %p18, %s19, %s20
      %p24 = pneg %p18
      %p25 = scmp.eq.s32.totalorder %s9, 1
      %p26 = por %p24, %p25
      %p27 = scmp.ne.s32.totalorder %s19, %s22
      %p28 = scmp.eq.s32.totalorder %s9, 0
      %p29 = por %p27, %p28
      %p30 = scmp.ne.s32.totalorder %s19, %s22
      %p31 = scmp.eq.s32.totalorder %s14, 1
      %p32 = por %p30, %p31
      %p33 = scmp.ne.s32.totalorder %s22, %s23
      %p34 = scmp.eq.s32.totalorder %s14, 0
      %p35 = por %p33, %p34
      %p36 = scmp.ne.s32.totalorder %s22, %s23
      %p37 = scmp.eq.s32.totalorder %s15, 1
      %p38 = por %p36, %p37
      %p40 = scmp.ne.s32.totalorder %s23, %s39
      %p41 = scmp.eq.s32.totalorder %s15, 0
      %p42 = por %p40, %p41
      %s44 = sadd.s32 %s43, 1
      %p47 = scmp.eq.s32.totalorder %s9, 1
      %p48 = scmp.ne.s32.totalorder %s43, %s45
      %p49 = scmp.eq.s32.totalorder %s9, 0
      %p50 = por %p48, %p49
      %p51 = scmp.ne.s32.totalorder %s43, %s45
      %p52 = scmp.eq.s32.totalorder %s14, 1
      %p53 = por %p51, %p52
      %p54 = scmp.ne.s32.totalorder %s45, %s46
      %p55 = scmp.eq.s32.totalorder %s14, 0
      %p56 = por %p54, %p55
      %p57 = scmp.ne.s32.totalorder %s45, %s46
      %p58 = scmp.eq.s32.totalorder %s15, 1
      %p59 = por %p57, %p58
      %p61 = scmp.ne.s32.totalorder %s46, %s60
      %p62 = scmp.eq.s32.totalorder %s15, 0
      %p63 = por %p61, %p62
      %s65 = sadd.s32 %s64, 1
      %p68 = scmp.eq.s32.totalorder %s9, 1
      %p69 = scmp.ne.s32.totalorder %s64, %s66
      %p70 = scmp.eq.s32.totalorder %s9, 0
      %p71 = por %p69, %p70
      %p72 = scmp.ne.s32.totalorder %s64, %s66
      %p73 = scmp.eq.s32.totalorder %s14, 1
      %p74 = por %p72, %p73
      %p75 = scmp.ne.s32.totalorder %s66, %s67
      %p76 = scmp.eq.s32.totalorder %s14, 0
      %p77 = por %p75, %p76
      %p78 = scmp.ne.s32.totalorder %s66, %s67
      %p79 = scmp.eq.s32.totalorder %s15, 1
      %p80 = por %p78, %p79
      %p82 = scmp.ne.s32.totalorder %s67, %s81
      %p83 = scmp.eq.s32.totalorder %s15, 0
      %p84 = por %p82, %p83
      %s85 = ssub.s32 %s9, %s16
      %p86 = scmp.eq.s32.totalorder %s85, 0
      %s88 = sadd.s32 %s87, 1
      %s89 = scalar_select %p86, %s87, %s88
      %p92 = pneg %p86
      %p93 = scmp.eq.s32.totalorder %s9, 1
      %p94 = por %p92, %p93
      %p95 = scmp.ne.s32.totalorder %s87, %s90
      %p96 = scmp.eq.s32.totalorder %s9, 0
      %p97 = por %p95, %p96
      %p98 = scmp.ne.s32.totalorder %s87, %s90
      %p99 = scmp.eq.s32.totalorder %s14, 1
      %p100 = por %p98, %p99
      %p101 = scmp.ne.s32.totalorder %s90, %s91
      %p102 = scmp.eq.s32.totalorder %s14, 0
      %p103 = por %p101, %p102
      %p104 = scmp.ne.s32.totalorder %s90, %s91
      %p105 = scmp.eq.s32.totalorder %s15, 1
      %p106 = por %p104, %p105
      %p108 = scmp.ne.s32.totalorder %s91, %s107
      %p109 = scmp.eq.s32.totalorder %s15, 0
      %p110 = por %p108, %p109
      %p111 = scmp.le.s32.totalorder 1, %s9
      %p112 = scmp.lt.s32.totalorder %s9, 3
      %p113 = pnand %p111, %p112
      %p114 = pneg %p113
      // Predicated region
      $region9: #{small_bais_conv_forward.1} parent=5 // pred_check
        _
      $region10: #{small_bais_conv_forward.1} parent=5 // pred_check_branch
        %116 = sbr.rel (%p113) target = $region12
      $region11: #{small_bais_conv_forward.1} parent=5 // pred_region
        %s117 = ssub.s32 %s9, 1
        // Predicated region
        $region13: #{small_bais_conv_forward.1} parent=11 // pred_check
          %p118 = pneg %p56
        $region14: #{small_bais_conv_forward.1} parent=11 // pred_check_branch
          %120 = sbr.rel (%p118) target = $region16
        $region15: #{small_bais_conv_forward.1} parent=11 // pred_region
          _
        $region16: #{small_bais_conv_forward.1} parent=11 // pred_fallthru
          _
        // Predicated region
        $region17: #{small_bais_conv_forward.1} parent=11 // pred_check
          %p121 = pneg %p77
        $region18: #{small_bais_conv_forward.1} parent=11 // pred_check_branch
          %123 = sbr.rel (%p121) target = $region20
        $region19: #{small_bais_conv_forward.1} parent=11 // pred_region
          _
        $region20: #{small_bais_conv_forward.1} parent=11 // pred_fallthru
          _
      $region12: #{small_bais_conv_forward.1} parent=5 // pred_fallthru
        _
      %p124 = scmp.lt.s32.totalorder %s9, 2
      // Predicated region
      $region21: #{small_bais_conv_forward.1} parent=5 // pred_check
        %p125 = pneg %p124
      $region22: #{small_bais_conv_forward.1} parent=5 // pred_check_branch
        %127 = sbr.rel (%p125) target = $region24
      $region23: #{small_bais_conv_forward.1} parent=5 // pred_region
        // Predicated region
        $region25: #{small_bais_conv_forward.1} parent=23 // pred_check
          %p128 = pneg %p29
        $region26: #{small_bais_conv_forward.1} parent=23 // pred_check_branch
          %130 = sbr.rel (%p128) target = $region28
        $region27: #{small_bais_conv_forward.1} parent=23 // pred_region
          %s131 = smul.u32 2, %s9
          %p132 = scmp.lt.s32.totalorder %s131, 3
          %s133 = scalar_select %p132, %s131, 3
          %s134 = smul.addr %s133, 8
          %s135 = scalar_lea.vmem %s0, %s134
          %s136 = smul.u32 2, %s9
        $region28: #{small_bais_conv_forward.1} parent=23 // pred_fallthru
          _
      $region24: #{small_bais_conv_forward.1} parent=5 // pred_fallthru
        _
      %p137 = scmp.le.s32.totalorder 1, %s9
      %p138 = scmp.lt.s32.totalorder %s9, 3
      %p139 = pnand %p137, %p138
      %p140 = pneg %p139
      // Predicated region
      $region29: #{small_bais_conv_forward.1} parent=5 // pred_check
        _
      $region30: #{small_bais_conv_forward.1} parent=5 // pred_check_branch
        %142 = sbr.rel (%p139) target = $region32
      $region31: #{small_bais_conv_forward.1} parent=5 // pred_region
        %s143 = ssub.s32 %s9, 1
        %s144 = smul.u32 2, %s14
        %p145 = scmp.lt.s32.totalorder %s144, 3
        %s146 = scalar_select %p145, %s144, 3
        %s147 = smul.addr %s146, 8
        %s148 = scalar_lea.vmem %s0, %s147
        %p149 = pneg %p35
        %p150 = pneg %p32
        %p151 = pneg %p56
        %p152 = pneg %p53
        %p153 = pneg %p77
        %p154 = pneg %p74
        %p155 = pneg %p103
        %p156 = pneg %p100
        %s157 = sand.u32 %s90, 1
        %s158 = sand.u32 %s90, 1
        %s159 = smul.addr %s158, 64
        %s160 = scalar_lea.vmem [#allocation2], %s159
        %s161 = smul.u32 2, %s14
        %p162 = scmp.lt.s32.totalorder %s161, 3
        %s163 = scalar_select %p162, %s161, 3
        %s164 = smul.addr %s163, 8
        %s165 = scalar_lea.vmem %s0, %s164
        %s166 = smul.u32 2, %s14
        %s167 = smul.u32 2, %s14
        %v168 = vld [vmem:[%s165] sm:$0x1f]
        %v169 = vld [vmem:[%s165 + $0x8] sm:$0x1f]
        %v170 = vld [vmem:[%s1] ss:$4 sm:$0x3]
        %s171 = scalar_lea.vmem %s1, 1
        %v172 = vld [vmem:[%s171] ss:$4 sm:$0x3]
        %s173 = scalar_lea.vmem %s1, 2
        %v174 = vld [vmem:[%s173] ss:$4 sm:$0x3]
        %s175 = scalar_lea.vmem %s1, 3
        %v176 = vld [vmem:[%s175] ss:$4 sm:$0x3]
        %177 = vrot.lane.b32.xlu0 %v168, 17
        %v178 = vpop.permute.xlu0 %177
        %179 = vrot.lane.b32.xlu0 %v169, 17
        %v180 = vpop.permute.xlu0 %179
        %v181 = vlaneseq
        %v182 = vand.u32 %v181, 127
        %vm183 = vcmp.lt.s32.totalorder %v182, 17
        %v184 = vsel %vm183, %v178, %v180
        %v185 = vsel %vm183, %v180, %v178
        %v186 = vmul.f32 %v174, %v170
        %v188 = vlaneseq
        %v189 = vshrl.u32 %v188, 7
        %v190 = vsub.s32 0, %v189
        %v191 = vrot.slane %v186, %v190
        %v192 = vlaneseq
        %v193 = vshrl.u32 %v192, 7
        %v194 = vsub.s32 1, %v193
        %v195 = vrot.slane %v186, %v194
        %v198 = vmul.f32 %v185, %v191
        %v199 = vmul.f32 %v184, %v195
        %v200 = vld [vmem:[%s2] sm:$0xff]
        %v201 = vld [vmem:[%s2 + $0x8] sm:$0xff]
        %v202 = vld [vmem:[%s2 + $0x10] sm:$0xff]
        %v203 = vld [vmem:[%s2 + $0x18] sm:$0xff]
        %204 = vrot.lane.b32.xlu0 %v168, 16
        %v205 = vpop.permute.xlu0 %204
        %206 = vrot.lane.b32.xlu0 %v169, 16
        %v207 = vpop.permute.xlu0 %206
        %vm208 = vcmp.lt.s32.totalorder %v182, 16
        %v209 = vsel %vm208, %v205, %v207
        %v210 = vsel %vm208, %v207, %v205
        %v212 = vlaneseq
        %v213 = vshrl.u32 %v212, 7
        %v214 = vsub.s32 0, %v213
        %v215 = vrot.slane %v174, %v214
        %v216 = vlaneseq
        %v217 = vshrl.u32 %v216, 7
        %v218 = vsub.s32 1, %v217
        %v219 = vrot.slane %v174, %v218
        %v222 = vmul.f32 %v210, %v215
        %v223 = vmul.f32 %v209, %v219
        %s224 = scalar_lea.vmem %s2, 32
        %v225 = vld [vmem:[%s224] sm:$0xff]
        %v226 = vld [vmem:[%s224 + $0x8] sm:$0xff]
        %v227 = vld [vmem:[%s224 + $0x10] sm:$0xff]
        %v228 = vld [vmem:[%s224 + $0x18] sm:$0xff]
        %vm229 = vcmask 39936
        %v231 = vsel %vm229, %v225, 0
        %v234 = vsel %vm229, %v226, 0
        %v237 = vsel %vm229, %v227, 0
        %v240 = vsel %vm229, %v228, 0
        %vm242 = vcmask 1044480
        %v244 = vsel %vm242, %v222, 0
        %v247 = vsel %vm242, %v223, 0
        %249 = vmatprep.subr.mxu0 %v247
        %250 = vmatpush1.msra.mxu0 %v244
        %251 = vmatprep.subr.mxu0 0.0
        %252 = vmatpush1.msra.mxu0 0.0
        %253 = vmatprep.subr.mxu0 0.0
        %254 = vmatpush1.msra.mxu0 0.0
        %255 = vmatprep.subr.mxu0 0.0
        %256 = vmatpush1.msra.mxu0 0.0
        %257 = vmatprep.subr.mxu0 0.0
        %258 = vmatpush1.msra.mxu0 0.0
        %259 = vmatprep.subr.mxu0 0.0
        %260 = vmatpush1.msra.mxu0 0.0
        %261 = vmatprep.subr.mxu0 0.0
        %262 = vmatpush1.msra.mxu0 0.0
        %263 = vmatprep.subr.mxu0 0.0
        %264 = vmatpush1.msra.mxu0 0.0
        %265 = vmatprep.subr.mxu0 0.0
        %266 = vmatpush1.msra.mxu0 0.0
        %267 = vmatprep.subr.mxu0 0.0
        %268 = vmatpush1.msra.mxu0 0.0
        %269 = vmatprep.subr.mxu0 0.0
        %270 = vmatpush1.msra.mxu0 0.0
        %271 = vmatprep.subr.mxu0 0.0
        %272 = vmatpush1.msra.mxu0 0.0
        %273 = vmatprep.subr.mxu0 0.0
        %274 = vmatpush1.msra.mxu0 0.0
        %275 = vmatprep.subr.mxu0 0.0
        %276 = vmatpush1.msra.mxu0 0.0
        %277 = vmatprep.subr.mxu0 0.0
        %278 = vmatpush1.msra.mxu0 0.0
        %279 = vmatprep.subr.mxu0 0.0
        %280 = vmatpush1.msra.mxu0 0.0
        %281 = vmatprep.subr.mxu0 0.0
        %282 = vmatpush1.msra.mxu0 0.0
        %283 = vmatprep.subr.mxu0 0.0
        %284 = vmatpush1.msra.mxu0 0.0
        %285 = vmatprep.subr.mxu0 0.0
        %286 = vmatpush1.msra.mxu0 0.0
        %287 = vmatprep.subr.mxu0 0.0
        %288 = vmatpush1.msra.mxu0 0.0
        %289 = vmatprep.subr.mxu0 0.0
        %290 = vmatpush1.msra.mxu0 0.0
        %291 = vmatprep.subr.mxu0 0.0
        %292 = vmatpush1.msra.mxu0 0.0
        %293 = vmatprep.subr.mxu0 0.0
        %294 = vmatpush1.msra.mxu0 0.0
        %295 = vmatprep.subr.mxu0 0.0
        %296 = vmatpush1.msra.mxu0 0.0
        %297 = vmatprep.subr.mxu0 0.0
        %298 = vmatpush1.msra.mxu0 0.0
        %299 = vmatprep.subr.mxu0 0.0
        %300 = vmatpush1.msra.mxu0 0.0
        %301 = vmatprep.subr.mxu0 0.0
        %302 = vmatpush1.msra.mxu0 0.0
        %303 = vmatprep.subr.mxu0 0.0
        %304 = vmatpush1.msra.mxu0 0.0
        %305 = vmatprep.subr.mxu0 0.0
        %306 = vmatpush1.msra.mxu0 0.0
        %307 = vmatprep.subr.mxu0 0.0
        %308 = vmatpush1.msra.mxu0 0.0
        %309 = vmatprep.subr.mxu0 0.0
        %310 = vmatpush1.msra.mxu0 0.0
        %311 = vmatprep.subr.mxu0 0.0
        %312 = vmatpush1.msra.mxu0 0.0
        %313 = vmatprep.mubr.f32.mxu0 0.0
        %314 = vmatmul.mubr.f32.gmra.mrb[0].mxu0 %v231
        %v315 = vpop.f32.mrb[0].mxu0
        %v316 = vadd.f32 0.0, %v315
        %v317 = vpop.f32.mrb[0].mxu0
        %v318 = vadd.f32 0.0, %v317
        %319 = vmatprep.mubr.f32.mxu0 0.0
        %320 = vmatmul.mubr.f32.gmra.mrb[0].mxu0 %v234
        %v321 = vpop.f32.mrb[0].mxu0
        %v322 = vadd.f32 0.0, %v321
        %v323 = vpop.f32.mrb[0].mxu0
        %v324 = vadd.f32 0.0, %v323
        %325 = vmatprep.mubr.f32.mxu0 0.0
        %326 = vmatmul.mubr.f32.gmra.mrb[0].mxu0 %v237
        %v327 = vpop.f32.mrb[0].mxu0
        %v328 = vadd.f32 0.0, %v327
        %v329 = vpop.f32.mrb[0].mxu0
        %v330 = vadd.f32 0.0, %v329
        %331 = vmatprep.mubr.f32.mxu0 0.0
        %332 = vmatmul.mubr.f32.gmra.mrb[0].mxu0 %v240
        %v333 = vpop.f32.mrb[0].mxu0
        %v334 = vadd.f32 0.0, %v333
        %v335 = vpop.f32.mrb[0].mxu0
        %v336 = vadd.f32 0.0, %v335
        %337 = vdwg.mxu0
        %v339 = vsel %vm229, %v200, 0
        %v342 = vsel %vm229, %v201, 0
        %v345 = vsel %vm229, %v202, 0
        %v348 = vsel %vm229, %v203, 0
        %v351 = vsel %vm242, %v198, 0
        %v354 = vsel %vm242, %v199, 0
        %356 = vmatprep.subr.mxu0 %v354
        %357 = vmatpush1.msra.mxu0 %v351
        %358 = vmatprep.subr.mxu0 0.0
        %359 = vmatpush1.msra.mxu0 0.0
        %360 = vmatprep.subr.mxu0 0.0
        %361 = vmatpush1.msra.mxu0 0.0
        %362 = vmatprep.subr.mxu0 0.0
        %363 = vmatpush1.msra.mxu0 0.0
        %364 = vmatprep.subr.mxu0 0.0
        %365 = vmatpush1.msra.mxu0 0.0
        %366 = vmatprep.subr.mxu0 0.0
        %367 = vmatpush1.msra.mxu0 0.0
        %368 = vmatprep.subr.mxu0 0.0
        %369 = vmatpush1.msra.mxu0 0.0
        %370 = vmatprep.subr.mxu0 0.0
        %371 = vmatpush1.msra.mxu0 0.0
        %372 = vmatprep.subr.mxu0 0.0
        %373 = vmatpush1.msra.mxu0 0.0
        %374 = vmatprep.subr.mxu0 0.0
        %375 = vmatpush1.msra.mxu0 0.0
        %376 = vmatprep.subr.mxu0 0.0
        %377 = vmatpush1.msra.mxu0 0.0
        %378 = vmatprep.subr.mxu0 0.0
        %379 = vmatpush1.msra.mxu0 0.0
        %380 = vmatprep.subr.mxu0 0.0
        %381 = vmatpush1.msra.mxu0 0.0
        %382 = vmatprep.subr.mxu0 0.0
        %383 = vmatpush1.msra.mxu0 0.0
        %384 = vmatprep.subr.mxu0 0.0
        %385 = vmatpush1.msra.mxu0 0.0
        %386 = vmatprep.subr.mxu0 0.0
        %387 = vmatpush1.msra.mxu0 0.0
        %388 = vmatprep.subr.mxu0 0.0
        %389 = vmatpush1.msra.mxu0 0.0
        %390 = vmatprep.subr.mxu0 0.0
        %391 = vmatpush1.msra.mxu0 0.0
        %392 = vmatprep.subr.mxu0 0.0
        %393 = vmatpush1.msra.mxu0 0.0
        %394 = vmatprep.subr.mxu0 0.0
        %395 = vmatpush1.msra.mxu0 0.0
        %396 = vmatprep.subr.mxu0 0.0
        %397 = vmatpush1.msra.mxu0 0.0
        %398 = vmatprep.subr.mxu0 0.0
        %399 = vmatpush1.msra.mxu0 0.0
        %400 = vmatprep.subr.mxu0 0.0
        %401 = vmatpush1.msra.mxu0 0.0
        %402 = vmatprep.subr.mxu0 0.0
        %403 = vmatpush1.msra.mxu0 0.0
        %404 = vmatprep.subr.mxu0 0.0
        %405 = vmatpush1.msra.mxu0 0.0
        %406 = vmatprep.subr.mxu0 0.0
        %407 = vmatpush1.msra.mxu0 0.0
        %408 = vmatprep.subr.mxu0 0.0
        %409 = vmatpush1.msra.mxu0 0.0
        %410 = vmatprep.subr.mxu0 0.0
        %411 = vmatpush1.msra.mxu0 0.0
        %412 = vmatprep.subr.mxu0 0.0
        %413 = vmatpush1.msra.mxu0 0.0
        %414 = vmatprep.subr.mxu0 0.0
        %415 = vmatpush1.msra.mxu0 0.0
        %416 = vmatprep.subr.mxu0 0.0
        %417 = vmatpush1.msra.mxu0 0.0
        %418 = vmatprep.subr.mxu0 0.0
        %419 = vmatpush1.msra.mxu0 0.0
        %420 = vmatprep.mubr.f32.mxu0 0.0
        %421 = vmatmul.mubr.f32.gmra.mrb[0].mxu0 %v339
        %v422 = vpop.f32.mrb[0].mxu0
        %v423 = vadd.f32 %v316, %v422
        %v424 = vpop.f32.mrb[0].mxu0
        %v425 = vadd.f32 %v318, %v424
        %426 = vmatprep.mubr.f32.mxu0 0.0
        %427 = vmatmul.mubr.f32.gmra.mrb[0].mxu0 %v342
        %v428 = vpop.f32.mrb[0].mxu0
        %v429 = vadd.f32 %v322, %v428
        %v430 = vpop.f32.mrb[0].mxu0
        %v431 = vadd.f32 %v324, %v430
        %432 = vmatprep.mubr.f32.mxu0 0.0
        %433 = vmatmul.mubr.f32.gmra.mrb[0].mxu0 %v345
        %v434 = vpop.f32.mrb[0].mxu0
        %v435 = vadd.f32 %v328, %v434
        %v436 = vpop.f32.mrb[0].mxu0
        %v437 = vadd.f32 %v330, %v436
        %438 = vmatprep.mubr.f32.mxu0 0.0
        %439 = vmatmul.mubr.f32.gmra.mrb[0].mxu0 %v348
        %v440 = vpop.f32.mrb[0].mxu0
        %v441 = vadd.f32 %v334, %v440
        %v442 = vpop.f32.mrb[0].mxu0
        %v443 = vadd.f32 %v336, %v442
        %444 = vdwg.mxu0
        %445 = vrot.lane.b32.xlu0 %v168, 15
        %v446 = vpop.permute.xlu0 %445
        %447 = vrot.lane.b32.xlu0 %v169, 15
        %v448 = vpop.permute.xlu0 %447
        %vm449 = vcmp.lt.s32.totalorder %v182, 15
        %v450 = vsel %vm449, %v446, %v448
        %v451 = vsel %vm449, %v448, %v446
        %v452 = vmul.f32 %v174, %v172
        %v454 = vlaneseq
        %v455 = vshrl.u32 %v454, 7
        %v456 = vsub.s32 0, %v455
        %v457 = vrot.slane %v452, %v456
        %v458 = vlaneseq
        %v459 = vshrl.u32 %v458, 7
        %v460 = vsub.s32 1, %v459
        %v461 = vrot.slane %v452, %v460
        %v464 = vmul.f32 %v451, %v457
        %v465 = vmul.f32 %v450, %v461
        %s466 = scalar_lea.vmem %s2, 64
        %v467 = vld [vmem:[%s466] sm:$0xff]
        %v468 = vld [vmem:[%s466 + $0x8] sm:$0xff]
        %v469 = vld [vmem:[%s466 + $0x10] sm:$0xff]
        %v470 = vld [vmem:[%s466 + $0x18] sm:$0xff]
        %v472 = vsel %vm229, %v467, 0
        %v475 = vsel %vm229, %v468, 0
        %v478 = vsel %vm229, %v469, 0
        %v481 = vsel %vm229, %v470, 0
        %v484 = vsel %vm242, %v464, 0
        %v487 = vsel %vm242, %v465, 0
        %489 = vmatprep.subr.mxu0 %v487
        %490 = vmatpush1.msra.mxu0 %v484
        %491 = vmatprep.subr.mxu0 0.0
        %492 = vmatpush1.msra.mxu0 0.0
        %493 = vmatprep.subr.mxu0 0.0
        %494 = vmatpush1.msra.mxu0 0.0
        %495 = vmatprep.subr.mxu0 0.0
        %496 = vmatpush1.msra.mxu0 0.0
        %497 = vmatprep.subr.mxu0 0.0
        %498 = vmatpush1.msra.mxu0 0.0
        %499 = vmatprep.subr.mxu0 0.0
        %500 = vmatpush1.msra.mxu0 0.0
        %501 = vmatprep.subr.mxu0 0.0
        %502 = vmatpush1.msra.mxu0 0.0
        %503 = vmatprep.subr.mxu0 0.0
        %504 = vmatpush1.msra.mxu0 0.0
        %505 = vmatprep.subr.mxu0 0.0
        %506 = vmatpush1.msra.mxu0 0.0
        %507 = vmatprep.subr.mxu0 0.0
        %508 = vmatpush1.msra.mxu0 0.0
        %509 = vmatprep.subr.mxu0 0.0
        %510 = vmatpush1.msra.mxu0 0.0
        %511 = vmatprep.subr.mxu0 0.0
        %512 = vmatpush1.msra.mxu0 0.0
        %513 = vmatprep.subr.mxu0 0.0
        %514 = vmatpush1.msra.mxu0 0.0
        %515 = vmatprep.subr.mxu0 0.0
        %516 = vmatpush1.msra.mxu0 0.0
        %517 = vmatprep.subr.mxu0 0.0
        %518 = vmatpush1.msra.mxu0 0.0
        %519 = vmatprep.subr.mxu0 0.0
        %520 = vmatpush1.msra.mxu0 0.0
        %521 = vmatprep.subr.mxu0 0.0
        %522 = vmatpush1.msra.mxu0 0.0
        %523 = vmatprep.subr.mxu0 0.0
        %524 = vmatpush1.msra.mxu0 0.0
        %525 = vmatprep.subr.mxu0 0.0
        %526 = vmatpush1.msra.mxu0 0.0
        %527 = vmatprep.subr.mxu0 0.0
        %528 = vmatpush1.msra.mxu0 0.0
        %529 = vmatprep.subr.mxu0 0.0
        %530 = vmatpush1.msra.mxu0 0.0
        %531 = vmatprep.subr.mxu0 0.0
        %532 = vmatpush1.msra.mxu0 0.0
        %533 = vmatprep.subr.mxu0 0.0
        %534 = vmatpush1.msra.mxu0 0.0
        %535 = vmatprep.subr.mxu0 0.0
        %536 = vmatpush1.msra.mxu0 0.0
        %537 = vmatprep.subr.mxu0 0.0
        %538 = vmatpush1.msra.mxu0 0.0
        %539 = vmatprep.subr.mxu0 0.0
        %540 = vmatpush1.msra.mxu0 0.0
        %541 = vmatprep.subr.mxu0 0.0
        %542 = vmatpush1.msra.mxu0 0.0
        %543 = vmatprep.subr.mxu0 0.0
        %544 = vmatpush1.msra.mxu0 0.0
        %545 = vmatprep.subr.mxu0 0.0
        %546 = vmatpush1.msra.mxu0 0.0
        %547 = vmatprep.subr.mxu0 0.0
        %548 = vmatpush1.msra.mxu0 0.0
        %549 = vmatprep.subr.mxu0 0.0
        %550 = vmatpush1.msra.mxu0 0.0
        %551 = vmatprep.subr.mxu0 0.0
        %552 = vmatpush1.msra.mxu0 0.0
        %553 = vmatprep.mubr.f32.mxu0 0.0
        %554 = vmatmul.mubr.f32.gmra.mrb[0].mxu0 %v472
        %v555 = vpop.f32.mrb[0].mxu0
        %v556 = vadd.f32 0.0, %v555
        %v557 = vpop.f32.mrb[0].mxu0
        %v558 = vadd.f32 0.0, %v557
        %559 = vmatprep.mubr.f32.mxu0 0.0
        %560 = vmatmul.mubr.f32.gmra.mrb[0].mxu0 %v475
        %v561 = vpop.f32.mrb[0].mxu0
        %v562 = vadd.f32 0.0, %v561
        %v563 = vpop.f32.mrb[0].mxu0
        %v564 = vadd.f32 0.0, %v563
        %565 = vmatprep.mubr.f32.mxu0 0.0
        %566 = vmatmul.mubr.f32.gmra.mrb[0].mxu0 %v478
        %v567 = vpop.f32.mrb[0].mxu0
        %v568 = vadd.f32 0.0, %v567
        %v569 = vpop.f32.mrb[0].mxu0
        %v570 = vadd.f32 0.0, %v569
        %571 = vmatprep.mubr.f32.mxu0 0.0
        %572 = vmatmul.mubr.f32.gmra.mrb[0].mxu0 %v481
        %v573 = vpop.f32.mrb[0].mxu0
        %v574 = vadd.f32 0.0, %v573
        %v575 = vpop.f32.mrb[0].mxu0
        %v576 = vadd.f32 0.0, %v575
        %577 = vdwg.mxu0
        %v578 = vadd.f32 %v423, %v556
        %v579 = vadd.f32 %v425, %v558
        %v580 = vadd.f32 %v429, %v562
        %v581 = vadd.f32 %v431, %v564
        %v582 = vadd.f32 %v435, %v568
        %v583 = vadd.f32 %v437, %v570
        %v584 = vadd.f32 %v441, %v574
        %v585 = vadd.f32 %v443, %v576
        %586 = vrot.lane.b32.xlu0 %v168, 1
        %v587 = vpop.permute.xlu0 %586
        %588 = vrot.lane.b32.xlu0 %v169, 1
        %v589 = vpop.permute.xlu0 %588
        %vm590 = vcmp.lt.s32.totalorder %v182, 1
        %v591 = vsel %vm590, %v587, %v589
        %v592 = vsel %vm590, %v589, %v587
        %v594 = vlaneseq
        %v595 = vshrl.u32 %v594, 7
        %v596 = vsub.s32 0, %v595
        %v597 = vrot.slane %v170, %v596
        %v598 = vlaneseq
        %v599 = vshrl.u32 %v598, 7
        %v600 = vsub.s32 1, %v599
        %v601 = vrot.slane %v170, %v600
        %v604 = vmul.f32 %v592, %v597
        %v605 = vmul.f32 %v591, %v601
        %s606 = scalar_lea.vmem %s2, 96
        %v607 = vld [vmem:[%s606] sm:$0xff]
        %v608 = vld [vmem:[%s606 + $0x8] sm:$0xff]
        %v609 = vld [vmem:[%s606 + $0x10] sm:$0xff]
        %v610 = vld [vmem:[%s606 + $0x18] sm:$0xff]
        %v612 = vsel %vm229, %v607, 0
        %v615 = vsel %vm229, %v608, 0
        %v618 = vsel %vm229, %v609, 0
        %v621 = vsel %vm229, %v610, 0
        %v624 = vsel %vm242, %v604, 0
        %v627 = vsel %vm242, %v605, 0
        %629 = vmatprep.subr.mxu0 %v627
        %630 = vmatpush1.msra.mxu0 %v624
        %631 = vmatprep.subr.mxu0 0.0
        %632 = vmatpush1.msra.mxu0 0.0
        %633 = vmatprep.subr.mxu0 0.0
        %634 = vmatpush1.msra.mxu0 0.0
        %635 = vmatprep.subr.mxu0 0.0
        %636 = vmatpush1.msra.mxu0 0.0
        %637 = vmatprep.subr.mxu0 0.0
        %638 = vmatpush1.msra.mxu0 0.0
        %639 = vmatprep.subr.mxu0 0.0
        %640 = vmatpush1.msra.mxu0 0.0
        %641 = vmatprep.subr.mxu0 0.0
        %642 = vmatpush1.msra.mxu0 0.0
        %643 = vmatprep.subr.mxu0 0.0
        %644 = vmatpush1.msra.mxu0 0.0
        %645 = vmatprep.subr.mxu0 0.0
        %646 = vmatpush1.msra.mxu0 0.0
        %647 = vmatprep.subr.mxu0 0.0
        %648 = vmatpush1.msra.mxu0 0.0
        %649 = vmatprep.subr.mxu0 0.0
        %650 = vmatpush1.msra.mxu0 0.0
        %651 = vmatprep.subr.mxu0 0.0
        %652 = vmatpush1.msra.mxu0 0.0
        %653 = vmatprep.subr.mxu0 0.0
        %654 = vmatpush1.msra.mxu0 0.0
        %655 = vmatprep.subr.mxu0 0.0
        %656 = vmatpush1.msra.mxu0 0.0
        %657 = vmatprep.subr.mxu0 0.0
        %658 = vmatpush1.msra.mxu0 0.0
        %659 = vmatprep.subr.mxu0 0.0
        %660 = vmatpush1.msra.mxu0 0.0
        %661 = vmatprep.subr.mxu0 0.0
        %662 = vmatpush1.msra.mxu0 0.0
        %663 = vmatprep.subr.mxu0 0.0
        %664 = vmatpush1.msra.mxu0 0.0
        %665 = vmatprep.subr.mxu0 0.0
        %666 = vmatpush1.msra.mxu0 0.0
        %667 = vmatprep.subr.mxu0 0.0
        %668 = vmatpush1.msra.mxu0 0.0
        %669 = vmatprep.subr.mxu0 0.0
        %670 = vmatpush1.msra.mxu0 0.0
        %671 = vmatprep.subr.mxu0 0.0
        %672 = vmatpush1.msra.mxu0 0.0
        %673 = vmatprep.subr.mxu0 0.0
        %674 = vmatpush1.msra.mxu0 0.0
        %675 = vmatprep.subr.mxu0 0.0
        %676 = vmatpush1.msra.mxu0 0.0
        %677 = vmatprep.subr.mxu0 0.0
        %678 = vmatpush1.msra.mxu0 0.0
        %679 = vmatprep.subr.mxu0 0.0
        %680 = vmatpush1.msra.mxu0 0.0
        %681 = vmatprep.subr.mxu0 0.0
        %682 = vmatpush1.msra.mxu0 0.0
        %683 = vmatprep.subr.mxu0 0.0
        %684 = vmatpush1.msra.mxu0 0.0
        %685 = vmatprep.subr.mxu0 0.0
        %686 = vmatpush1.msra.mxu0 0.0
        %687 = vmatprep.subr.mxu0 0.0
        %688 = vmatpush1.msra.mxu0 0.0
        %689 = vmatprep.subr.mxu0 0.0
        %690 = vmatpush1.msra.mxu0 0.0
        %691 = vmatprep.subr.mxu0 0.0
        %692 = vmatpush1.msra.mxu0 0.0
        %693 = vmatprep.mubr.f32.mxu0 0.0
        %694 = vmatmul.mubr.f32.gmra.mrb[0].mxu0 %v612
        %v695 = vpop.f32.mrb[0].mxu0
        %v696 = vadd.f32 0.0, %v695
        %v697 = vpop.f32.mrb[0].mxu0
        %v698 = vadd.f32 0.0, %v697
        %699 = vmatprep.mubr.f32.mxu0 0.0
        %700 = vmatmul.mubr.f32.gmra.mrb[0].mxu0 %v615
        %v701 = vpop.f32.mrb[0].mxu0
        %v702 = vadd.f32 0.0, %v701
        %v703 = vpop.f32.mrb[0].mxu0
        %v704 = vadd.f32 0.0, %v703
        %705 = vmatprep.mubr.f32.mxu0 0.0
        %706 = vmatmul.mubr.f32.gmra.mrb[0].mxu0 %v618
        %v707 = vpop.f32.mrb[0].mxu0
        %v708 = vadd.f32 0.0, %v707
        %v709 = vpop.f32.mrb[0].mxu0
        %v710 = vadd.f32 0.0, %v709
        %711 = vmatprep.mubr.f32.mxu0 0.0
        %712 = vmatmul.mubr.f32.gmra.mrb[0].mxu0 %v621
        %v713 = vpop.f32.mrb[0].mxu0
        %v714 = vadd.f32 0.0, %v713
        %v715 = vpop.f32.mrb[0].mxu0
        %v716 = vadd.f32 0.0, %v715
        %717 = vdwg.mxu0
        %v718 = vadd.f32 %v578, %v696
        %v719 = vadd.f32 %v579, %v698
        %v720 = vadd.f32 %v580, %v702
        %v721 = vadd.f32 %v581, %v704
        %v722 = vadd.f32 %v582, %v708
        %v723 = vadd.f32 %v583, %v710
        %v724 = vadd.f32 %v584, %v714
        %v725 = vadd.f32 %v585, %v716
        %s726 = scalar_lea.vmem %s2, 128
        %v727 = vld [vmem:[%s726] sm:$0xff]
        %v728 = vld [vmem:[%s726 + $0x8] sm:$0xff]
        %v729 = vld [vmem:[%s726 + $0x10] sm:$0xff]
        %v730 = vld [vmem:[%s726 + $0x18] sm:$0xff]
        %v732 = vsel %vm229, %v727, 0
        %v735 = vsel %vm229, %v728, 0
        %v738 = vsel %vm229, %v729, 0
        %v741 = vsel %vm229, %v730, 0
        %v744 = vsel %vm242, %v168, 0
        %v747 = vsel %vm242, %v169, 0
        %749 = vmatprep.subr.mxu0 %v747
        %750 = vmatpush1.msra.mxu0 %v744
        %751 = vmatprep.subr.mxu0 0.0
        %752 = vmatpush1.msra.mxu0 0.0
        %753 = vmatprep.subr.mxu0 0.0
        %754 = vmatpush1.msra.mxu0 0.0
        %755 = vmatprep.subr.mxu0 0.0
        %756 = vmatpush1.msra.mxu0 0.0
        %757 = vmatprep.subr.mxu0 0.0
        %758 = vmatpush1.msra.mxu0 0.0
        %759 = vmatprep.subr.mxu0 0.0
        %760 = vmatpush1.msra.mxu0 0.0
        %761 = vmatprep.subr.mxu0 0.0
        %762 = vmatpush1.msra.mxu0 0.0
        %763 = vmatprep.subr.mxu0 0.0
        %764 = vmatpush1.msra.mxu0 0.0
        %765 = vmatprep.subr.mxu0 0.0
        %766 = vmatpush1.msra.mxu0 0.0
        %767 = vmatprep.subr.mxu0 0.0
        %768 = vmatpush1.msra.mxu0 0.0
        %769 = vmatprep.subr.mxu0 0.0
        %770 = vmatpush1.msra.mxu0 0.0
        %771 = vmatprep.subr.mxu0 0.0
        %772 = vmatpush1.msra.mxu0 0.0
        %773 = vmatprep.subr.mxu0 0.0
        %774 = vmatpush1.msra.mxu0 0.0
        %775 = vmatprep.subr.mxu0 0.0
        %776 = vmatpush1.msra.mxu0 0.0
        %777 = vmatprep.subr.mxu0 0.0
        %778 = vmatpush1.msra.mxu0 0.0
        %779 = vmatprep.subr.mxu0 0.0
        %780 = vmatpush1.msra.mxu0 0.0
        %781 = vmatprep.subr.mxu0 0.0
        %782 = vmatpush1.msra.mxu0 0.0
        %783 = vmatprep.subr.mxu0 0.0
        %784 = vmatpush1.msra.mxu0 0.0
        %785 = vmatprep.subr.mxu0 0.0
        %786 = vmatpush1.msra.mxu0 0.0
        %787 = vmatprep.subr.mxu0 0.0
        %788 = vmatpush1.msra.mxu0 0.0
        %789 = vmatprep.subr.mxu0 0.0
        %790 = vmatpush1.msra.mxu0 0.0
        %791 = vmatprep.subr.mxu0 0.0
        %792 = vmatpush1.msra.mxu0 0.0
        %793 = vmatprep.subr.mxu0 0.0
        %794 = vmatpush1.msra.mxu0 0.0
        %795 = vmatprep.subr.mxu0 0.0
        %796 = vmatpush1.msra.mxu0 0.0
        %797 = vmatprep.subr.mxu0 0.0
        %798 = vmatpush1.msra.mxu0 0.0
        %799 = vmatprep.subr.mxu0 0.0
        %800 = vmatpush1.msra.mxu0 0.0
        %801 = vmatprep.subr.mxu0 0.0
        %802 = vmatpush1.msra.mxu0 0.0
        %803 = vmatprep.subr.mxu0 0.0
        %804 = vmatpush1.msra.mxu0 0.0
        %805 = vmatprep.subr.mxu0 0.0
        %806 = vmatpush1.msra.mxu0 0.0
        %807 = vmatprep.subr.mxu0 0.0
        %808 = vmatpush1.msra.mxu0 0.0
        %809 = vmatprep.subr.mxu0 0.0
        %810 = vmatpush1.msra.mxu0 0.0
        %811 = vmatprep.subr.mxu0 0.0
        %812 = vmatpush1.msra.mxu0 0.0
        %813 = vmatprep.mubr.f32.mxu0 0.0
        %814 = vmatmul.mubr.f32.gmra.mrb[0].mxu0 %v732
        %v815 = vpop.f32.mrb[0].mxu0
        %v816 = vadd.f32 0.0, %v815
        %v817 = vpop.f32.mrb[0].mxu0
        %v818 = vadd.f32 0.0, %v817
        %819 = vmatprep.mubr.f32.mxu0 0.0
        %820 = vmatmul.mubr.f32.gmra.mrb[0].mxu0 %v735
        %v821 = vpop.f32.mrb[0].mxu0
        %v822 = vadd.f32 0.0, %v821
        %v823 = vpop.f32.mrb[0].mxu0
        %v824 = vadd.f32 0.0, %v823
        %825 = vmatprep.mubr.f32.mxu0 0.0
        %826 = vmatmul.mubr.f32.gmra.mrb[0].mxu0 %v738
        %v827 = vpop.f32.mrb[0].mxu0
        %v828 = vadd.f32 0.0, %v827
        %v829 = vpop.f32.mrb[0].mxu0
        %v830 = vadd.f32 0.0, %v829
        %831 = vmatprep.mubr.f32.mxu0 0.0
        %832 = vmatmul.mubr.f32.gmra.mrb[0].mxu0 %v741
        %v833 = vpop.f32.mrb[0].mxu0
        %v834 = vadd.f32 0.0, %v833
        %v835 = vpop.f32.mrb[0].mxu0
        %v836 = vadd.f32 0.0, %v835
        %837 = vdwg.mxu0
        %v838 = vadd.f32 %v718, %v816
        %v839 = vadd.f32 %v719, %v818
        %v840 = vadd.f32 %v720, %v822
        %v841 = vadd.f32 %v721, %v824
        %v842 = vadd.f32 %v722, %v828
        %v843 = vadd.f32 %v723, %v830
        %v844 = vadd.f32 %v724, %v834
        %v845 = vadd.f32 %v725, %v836
        %846 = vrot.lane.b32.xlu0 %v168, 127
        %v847 = vpop.permute.xlu0 %846
        %848 = vrot.lane.b32.xlu0 %v169, 127
        %v849 = vpop.permute.xlu0 %848
        %vm850 = vcmp.lt.s32.totalorder %v182, 127
        %v851 = vsel %vm850, %v847, %v849
        %v852 = vsel %vm850, %v849, %v847
        %v854 = vlaneseq
        %v855 = vshrl.u32 %v854, 7
        %v856 = vsub.s32 0, %v855
        %v857 = vrot.slane %v172, %v856
        %v858 = vlaneseq
        %v859 = vshrl.u32 %v858, 7
        %v860 = vsub.s32 1, %v859
        %v861 = vrot.slane %v172, %v860
        %v864 = vmul.f32 %v851, %v857
        %v865 = vmul.f32 %v852, %v861
        %s866 = scalar_lea.vmem %s2, 160
        %v867 = vld [vmem:[%s866] sm:$0xff]
        %v868 = vld [vmem:[%s866 + $0x8] sm:$0xff]
        %v869 = vld [vmem:[%s866 + $0x10] sm:$0xff]
        %v870 = vld [vmem:[%s866 + $0x18] sm:$0xff]
        %v872 = vsel %vm229, %v867, 0
        %v875 = vsel %vm229, %v868, 0
        %v878 = vsel %vm229, %v869, 0
        %v881 = vsel %vm229, %v870, 0
        %v884 = vsel %vm242, %v864, 0
        %v887 = vsel %vm242, %v865, 0
        %889 = vmatprep.subr.mxu0 %v887
        %890 = vmatpush1.msra.mxu0 %v884
        %891 = vmatprep.subr.mxu0 0.0
        %892 = vmatpush1.msra.mxu0 0.0
        %893 = vmatprep.subr.mxu0 0.0
        %894 = vmatpush1.msra.mxu0 0.0
        %895 = vmatprep.subr.mxu0 0.0
        %896 = vmatpush1.msra.mxu0 0.0
        %897 = vmatprep.subr.mxu0 0.0
        %898 = vmatpush1.msra.mxu0 0.0
        %899 = vmatprep.subr.mxu0 0.0
        %900 = vmatpush1.msra.mxu0 0.0
        %901 = vmatprep.subr.mxu0 0.0
        %902 = vmatpush1.msra.mxu0 0.0
        %903 = vmatprep.subr.mxu0 0.0
        %904 = vmatpush1.msra.mxu0 0.0
        %905 = vmatprep.subr.mxu0 0.0
        %906 = vmatpush1.msra.mxu0 0.0
        %907 = vmatprep.subr.mxu0 0.0
        %908 = vmatpush1.msra.mxu0 0.0
        %909 = vmatprep.subr.mxu0 0.0
        %910 = vmatpush1.msra.mxu0 0.0
        %911 = vmatprep.subr.mxu0 0.0
        %912 = vmatpush1.msra.mxu0 0.0
        %913 = vmatprep.subr.mxu0 0.0
        %914 = vmatpush1.msra.mxu0 0.0
        %915 = vmatprep.subr.mxu0 0.0
        %916 = vmatpush1.msra.mxu0 0.0
        %917 = vmatprep.subr.mxu0 0.0
        %918 = vmatpush1.msra.mxu0 0.0
        %919 = vmatprep.subr.mxu0 0.0
        %920 = vmatpush1.msra.mxu0 0.0
        %921 = vmatprep.subr.mxu0 0.0
        %922 = vmatpush1.msra.mxu0 0.0
        %923 = vmatprep.subr.mxu0 0.0
        %924 = vmatpush1.msra.mxu0 0.0
        %925 = vmatprep.subr.mxu0 0.0
        %926 = vmatpush1.msra.mxu0 0.0
        %927 = vmatprep.subr.mxu0 0.0
        %928 = vmatpush1.msra.mxu0 0.0
        %929 = vmatprep.subr.mxu0 0.0
        %930 = vmatpush1.msra.mxu0 0.0
        %931 = vmatprep.subr.mxu0 0.0
        %932 = vmatpush1.msra.mxu0 0.0
        %933 = vmatprep.subr.mxu0 0.0
        %934 = vmatpush1.msra.mxu0 0.0
        %935 = vmatprep.subr.mxu0 0.0
        %936 = vmatpush1.msra.mxu0 0.0
        %937 = vmatprep.subr.mxu0 0.0
        %938 = vmatpush1.msra.mxu0 0.0
        %939 = vmatprep.subr.mxu0 0.0
        %940 = vmatpush1.msra.mxu0 0.0
        %941 = vmatprep.subr.mxu0 0.0
        %942 = vmatpush1.msra.mxu0 0.0
        %943 = vmatprep.subr.mxu0 0.0
        %944 = vmatpush1.msra.mxu0 0.0
        %945 = vmatprep.subr.mxu0 0.0
        %946 = vmatpush1.msra.mxu0 0.0
        %947 = vmatprep.subr.mxu0 0.0
        %948 = vmatpush1.msra.mxu0 0.0
        %949 = vmatprep.subr.mxu0 0.0
        %950 = vmatpush1.msra.mxu0 0.0
        %951 = vmatprep.subr.mxu0 0.0
        %952 = vmatpush1.msra.mxu0 0.0
        %953 = vmatprep.mubr.f32.mxu0 0.0
        %954 = vmatmul.mubr.f32.gmra.mrb[0].mxu0 %v872
        %v955 = vpop.f32.mrb[0].mxu0
        %v956 = vadd.f32 0.0, %v955
        %v957 = vpop.f32.mrb[0].mxu0
        %v958 = vadd.f32 0.0, %v957
        %959 = vmatprep.mubr.f32.mxu0 0.0
        %960 = vmatmul.mubr.f32.gmra.mrb[0].mxu0 %v875
        %v961 = vpop.f32.mrb[0].mxu0
        %v962 = vadd.f32 0.0, %v961
        %v963 = vpop.f32.mrb[0].mxu0
        %v964 = vadd.f32 0.0, %v963
        %965 = vmatprep.mubr.f32.mxu0 0.0
        %966 = vmatmul.mubr.f32.gmra.mrb[0].mxu0 %v878
        %v967 = vpop.f32.mrb[0].mxu0
        %v968 = vadd.f32 0.0, %v967
        %v969 = vpop.f32.mrb[0].mxu0
        %v970 = vadd.f32 0.0, %v969
        %971 = vmatprep.mubr.f32.mxu0 0.0
        %972 = vmatmul.mubr.f32.gmra.mrb[0].mxu0 %v881
        %v973 = vpop.f32.mrb[0].mxu0
        %v974 = vadd.f32 0.0, %v973
        %v975 = vpop.f32.mrb[0].mxu0
        %v976 = vadd.f32 0.0, %v975
        %977 = vdwg.mxu0
        %v978 = vadd.f32 %v838, %v956
        %v979 = vadd.f32 %v839, %v958
        %v980 = vadd.f32 %v840, %v962
        %v981 = vadd.f32 %v841, %v964
        %v982 = vadd.f32 %v842, %v968
        %v983 = vadd.f32 %v843, %v970
        %v984 = vadd.f32 %v844, %v974
        %v985 = vadd.f32 %v845, %v976
        %986 = vrot.lane.b32.xlu0 %v168, 113
        %v987 = vpop.permute.xlu0 %986
        %988 = vrot.lane.b32.xlu0 %v169, 113
        %v989 = vpop.permute.xlu0 %988
        %vm990 = vcmp.lt.s32.totalorder %v182, 113
        %v991 = vsel %vm990, %v987, %v989
        %v992 = vsel %vm990, %v989, %v987
        %v993 = vmul.f32 %v176, %v170
        %v995 = vlaneseq
        %v996 = vshrl.u32 %v995, 7
        %v997 = vsub.s32 0, %v996
        %v998 = vrot.slane %v993, %v997
        %v999 = vlaneseq
        %v1000 = vshrl.u32 %v999, 7
        %v1001 = vsub.s32 1, %v1000
        %v1002 = vrot.slane %v993, %v1001
        %v1005 = vmul.f32 %v991, %v998
        %v1006 = vmul.f32 %v992, %v1002
        %s1007 = scalar_lea.vmem %s2, 192
        %v1008 = vld [vmem:[%s1007] sm:$0xff]
        %v1009 = vld [vmem:[%s1007 + $0x8] sm:$0xff]
        %v1010 = vld [vmem:[%s1007 + $0x10] sm:$0xff]
        %v1011 = vld [vmem:[%s1007 + $0x18] sm:$0xff]
        %v1013 = vsel %vm229, %v1008, 0
        %v1016 = vsel %vm229, %v1009, 0
        %v1019 = vsel %vm229, %v1010, 0
        %v1022 = vsel %vm229, %v1011, 0
        %v1025 = vsel %vm242, %v1005, 0
        %v1028 = vsel %vm242, %v1006, 0
        %1030 = vmatprep.subr.mxu0 %v1028
        %1031 = vmatpush1.msra.mxu0 %v1025
        %1032 = vmatprep.subr.mxu0 0.0
        %1033 = vmatpush1.msra.mxu0 0.0
        %1034 = vmatprep.subr.mxu0 0.0
        %1035 = vmatpush1.msra.mxu0 0.0
        %1036 = vmatprep.subr.mxu0 0.0
        %1037 = vmatpush1.msra.mxu0 0.0
        %1038 = vmatprep.subr.mxu0 0.0
        %1039 = vmatpush1.msra.mxu0 0.0
        %1040 = vmatprep.subr.mxu0 0.0
        %1041 = vmatpush1.msra.mxu0 0.0
        %1042 = vmatprep.subr.mxu0 0.0
        %1043 = vmatpush1.msra.mxu0 0.0
        %1044 = vmatprep.subr.mxu0 0.0
        %1045 = vmatpush1.msra.mxu0 0.0
        %1046 = vmatprep.subr.mxu0 0.0
        %1047 = vmatpush1.msra.mxu0 0.0
        %1048 = vmatprep.subr.mxu0 0.0
        %1049 = vmatpush1.msra.mxu0 0.0
        %1050 = vmatprep.subr.mxu0 0.0
        %1051 = vmatpush1.msra.mxu0 0.0
        %1052 = vmatprep.subr.mxu0 0.0
        %1053 = vmatpush1.msra.mxu0 0.0
        %1054 = vmatprep.subr.mxu0 0.0
        %1055 = vmatpush1.msra.mxu0 0.0
        %1056 = vmatprep.subr.mxu0 0.0
        %1057 = vmatpush1.msra.mxu0 0.0
        %1058 = vmatprep.subr.mxu0 0.0
        %1059 = vmatpush1.msra.mxu0 0.0
        %1060 = vmatprep.subr.mxu0 0.0
        %1061 = vmatpush1.msra.mxu0 0.0
        %1062 = vmatprep.subr.mxu0 0.0
        %1063 = vmatpush1.msra.mxu0 0.0
        %1064 = vmatprep.subr.mxu0 0.0
        %1065 = vmatpush1.msra.mxu0 0.0
        %1066 = vmatprep.subr.mxu0 0.0
        %1067 = vmatpush1.msra.mxu0 0.0
        %1068 = vmatprep.subr.mxu0 0.0
        %1069 = vmatpush1.msra.mxu0 0.0
        %1070 = vmatprep.subr.mxu0 0.0
        %1071 = vmatpush1.msra.mxu0 0.0
        %1072 = vmatprep.subr.mxu0 0.0
        %1073 = vmatpush1.msra.mxu0 0.0
        %1074 = vmatprep.subr.mxu0 0.0
        %1075 = vmatpush1.msra.mxu0 0.0
        %1076 = vmatprep.subr.mxu0 0.0
        %1077 = vmatpush1.msra.mxu0 0.0
        %1078 = vmatprep.subr.mxu0 0.0
        %1079 = vmatpush1.msra.mxu0 0.0
        %1080 = vmatprep.subr.mxu0 0.0
        %1081 = vmatpush1.msra.mxu0 0.0
        %1082 = vmatprep.subr.mxu0 0.0
        %1083 = vmatpush1.msra.mxu0 0.0
        %1084 = vmatprep.subr.mxu0 0.0
        %1085 = vmatpush1.msra.mxu0 0.0
        %1086 = vmatprep.subr.mxu0 0.0
        %1087 = vmatpush1.msra.mxu0 0.0
        %1088 = vmatprep.subr.mxu0 0.0
        %1089 = vmatpush1.msra.mxu0 0.0
        %1090 = vmatprep.subr.mxu0 0.0
        %1091 = vmatpush1.msra.mxu0 0.0
        %1092 = vmatprep.subr.mxu0 0.0
        %1093 = vmatpush1.msra.mxu0 0.0
        %1094 = vmatprep.mubr.f32.mxu0 0.0
        %1095 = vmatmul.mubr.f32.gmra.mrb[0].mxu0 %v1013
        %v1096 = vpop.f32.mrb[0].mxu0
        %v1097 = vadd.f32 0.0, %v1096
        %v1098 = vpop.f32.mrb[0].mxu0
        %v1099 = vadd.f32 0.0, %v1098
        %1100 = vmatprep.mubr.f32.mxu0 0.0
        %1101 = vmatmul.mubr.f32.gmra.mrb[0].mxu0 %v1016
        %v1102 = vpop.f32.mrb[0].mxu0
        %v1103 = vadd.f32 0.0, %v1102
        %v1104 = vpop.f32.mrb[0].mxu0
        %v1105 = vadd.f32 0.0, %v1104
        %1106 = vmatprep.mubr.f32.mxu0 0.0
        %1107 = vmatmul.mubr.f32.gmra.mrb[0].mxu0 %v1019
        %v1108 = vpop.f32.mrb[0].mxu0
        %v1109 = vadd.f32 0.0, %v1108
        %v1110 = vpop.f32.mrb[0].mxu0
        %v1111 = vadd.f32 0.0, %v1110
        %1112 = vmatprep.mubr.f32.mxu0 0.0
        %1113 = vmatmul.mubr.f32.gmra.mrb[0].mxu0 %v1022
        %v1114 = vpop.f32.mrb[0].mxu0
        %v1115 = vadd.f32 0.0, %v1114
        %v1116 = vpop.f32.mrb[0].mxu0
        %v1117 = vadd.f32 0.0, %v1116
        %1118 = vdwg.mxu0
        %v1119 = vadd.f32 %v978, %v1097
        %v1120 = vadd.f32 %v979, %v1099
        %v1121 = vadd.f32 %v980, %v1103
        %v1122 = vadd.f32 %v981, %v1105
        %v1123 = vadd.f32 %v982, %v1109
        %v1124 = vadd.f32 %v983, %v1111
        %v1125 = vadd.f32 %v984, %v1115
        %v1126 = vadd.f32 %v985, %v1117
        %1127 = vrot.lane.b32.xlu0 %v168, 112
        %v1128 = vpop.permute.xlu0 %1127
        %1129 = vrot.lane.b32.xlu0 %v169, 112
        %v1130 = vpop.permute.xlu0 %1129
        %vm1131 = vcmp.lt.s32.totalorder %v182, 112
        %v1132 = vsel %vm1131, %v1128, %v1130
        %v1133 = vsel %vm1131, %v1130, %v1128
        %v1135 = vlaneseq
        %v1136 = vshrl.u32 %v1135, 7
        %v1137 = vsub.s32 0, %v1136
        %v1138 = vrot.slane %v176, %v1137
        %v1139 = vlaneseq
        %v1140 = vshrl.u32 %v1139, 7
        %v1141 = vsub.s32 1, %v1140
        %v1142 = vrot.slane %v176, %v1141
        %v1145 = vmul.f32 %v1132, %v1138
        %v1146 = vmul.f32 %v1133, %v1142
        %s1147 = scalar_lea.vmem %s2, 224
        %v1148 = vld [vmem:[%s1147] sm:$0xff]
        %v1149 = vld [vmem:[%s1147 + $0x8] sm:$0xff]
        %v1150 = vld [vmem:[%s1147 + $0x10] sm:$0xff]
        %v1151 = vld [vmem:[%s1147 + $0x18] sm:$0xff]
        %v1153 = vsel %vm229, %v1148, 0
        %v1156 = vsel %vm229, %v1149, 0
        %v1159 = vsel %vm229, %v1150, 0
        %v1162 = vsel %vm229, %v1151, 0
        %v1165 = vsel %vm242, %v1145, 0
        %v1168 = vsel %vm242, %v1146, 0
        %1170 = vmatprep.subr.mxu0 %v1168
        %1171 = vmatpush1.msra.mxu0 %v1165
        %1172 = vmatprep.subr.mxu0 0.0
        %1173 = vmatpush1.msra.mxu0 0.0
        %1174 = vmatprep.subr.mxu0 0.0
        %1175 = vmatpush1.msra.mxu0 0.0
        %1176 = vmatprep.subr.mxu0 0.0
        %1177 = vmatpush1.msra.mxu0 0.0
        %1178 = vmatprep.subr.mxu0 0.0
        %1179 = vmatpush1.msra.mxu0 0.0
        %1180 = vmatprep.subr.mxu0 0.0
        %1181 = vmatpush1.msra.mxu0 0.0
        %1182 = vmatprep.subr.mxu0 0.0
        %1183 = vmatpush1.msra.mxu0 0.0
        %1184 = vmatprep.subr.mxu0 0.0
        %1185 = vmatpush1.msra.mxu0 0.0
        %1186 = vmatprep.subr.mxu0 0.0
        %1187 = vmatpush1.msra.mxu0 0.0
        %1188 = vmatprep.subr.mxu0 0.0
        %1189 = vmatpush1.msra.mxu0 0.0
        %1190 = vmatprep.subr.mxu0 0.0
        %1191 = vmatpush1.msra.mxu0 0.0
        %1192 = vmatprep.subr.mxu0 0.0
        %1193 = vmatpush1.msra.mxu0 0.0
        %1194 = vmatprep.subr.mxu0 0.0
        %1195 = vmatpush1.msra.mxu0 0.0
        %1196 = vmatprep.subr.mxu0 0.0
        %1197 = vmatpush1.msra.mxu0 0.0
        %1198 = vmatprep.subr.mxu0 0.0
        %1199 = vmatpush1.msra.mxu0 0.0
        %1200 = vmatprep.subr.mxu0 0.0
        %1201 = vmatpush1.msra.mxu0 0.0
        %1202 = vmatprep.subr.mxu0 0.0
        %1203 = vmatpush1.msra.mxu0 0.0
        %1204 = vmatprep.subr.mxu0 0.0
        %1205 = vmatpush1.msra.mxu0 0.0
        %1206 = vmatprep.subr.mxu0 0.0
        %1207 = vmatpush1.msra.mxu0 0.0
        %1208 = vmatprep.subr.mxu0 0.0
        %1209 = vmatpush1.msra.mxu0 0.0
        %1210 = vmatprep.subr.mxu0 0.0
        %1211 = vmatpush1.msra.mxu0 0.0
        %1212 = vmatprep.subr.mxu0 0.0
        %1213 = vmatpush1.msra.mxu0 0.0
        %1214 = vmatprep.subr.mxu0 0.0
        %1215 = vmatpush1.msra.mxu0 0.0
        %1216 = vmatprep.subr.mxu0 0.0
        %1217 = vmatpush1.msra.mxu0 0.0
        %1218 = vmatprep.subr.mxu0 0.0
        %1219 = vmatpush1.msra.mxu0 0.0
        %1220 = vmatprep.subr.mxu0 0.0
        %1221 = vmatpush1.msra.mxu0 0.0
        %1222 = vmatprep.subr.mxu0 0.0
        %1223 = vmatpush1.msra.mxu0 0.0
        %1224 = vmatprep.subr.mxu0 0.0
        %1225 = vmatpush1.msra.mxu0 0.0
        %1226 = vmatprep.subr.mxu0 0.0
        %1227 = vmatpush1.msra.mxu0 0.0
        %1228 = vmatprep.subr.mxu0 0.0
        %1229 = vmatpush1.msra.mxu0 0.0
        %1230 = vmatprep.subr.mxu0 0.0
        %1231 = vmatpush1.msra.mxu0 0.0
        %1232 = vmatprep.subr.mxu0 0.0
        %1233 = vmatpush1.msra.mxu0 0.0
        %1234 = vmatprep.mubr.f32.mxu0 0.0
        %1235 = vmatmul.mubr.f32.gmra.mrb[0].mxu0 %v1153
        %v1236 = vpop.f32.mrb[0].mxu0
        %v1237 = vadd.f32 0.0, %v1236
        %v1238 = vpop.f32.mrb[0].mxu0
        %v1239 = vadd.f32 0.0, %v1238
        %1240 = vmatprep.mubr.f32.mxu0 0.0
        %1241 = vmatmul.mubr.f32.gmra.mrb[0].mxu0 %v1156
        %v1242 = vpop.f32.mrb[0].mxu0
        %v1243 = vadd.f32 0.0, %v1242
        %v1244 = vpop.f32.mrb[0].mxu0
        %v1245 = vadd.f32 0.0, %v1244
        %1246 = vmatprep.mubr.f32.mxu0 0.0
        %1247 = vmatmul.mubr.f32.gmra.mrb[0].mxu0 %v1159
        %v1248 = vpop.f32.mrb[0].mxu0
        %v1249 = vadd.f32 0.0, %v1248
        %v1250 = vpop.f32.mrb[0].mxu0
        %v1251 = vadd.f32 0.0, %v1250
        %1252 = vmatprep.mubr.f32.mxu0 0.0
        %1253 = vmatmul.mubr.f32.gmra.mrb[0].mxu0 %v1162
        %v1254 = vpop.f32.mrb[0].mxu0
        %v1255 = vadd.f32 0.0, %v1254
        %v1256 = vpop.f32.mrb[0].mxu0
        %v1257 = vadd.f32 0.0, %v1256
        %1258 = vdwg.mxu0
        %v1259 = vadd.f32 %v1119, %v1237
        %v1260 = vadd.f32 %v1120, %v1239
        %v1261 = vadd.f32 %v1121, %v1243
        %v1262 = vadd.f32 %v1122, %v1245
        %v1263 = vadd.f32 %v1123, %v1249
        %v1264 = vadd.f32 %v1124, %v1251
        %v1265 = vadd.f32 %v1125, %v1255
        %v1266 = vadd.f32 %v1126, %v1257
        %1267 = vrot.lane.b32.xlu0 %v168, 111
        %v1268 = vpop.permute.xlu0 %1267
        %1269 = vrot.lane.b32.xlu0 %v169, 111
        %v1270 = vpop.permute.xlu0 %1269
        %vm1271 = vcmp.lt.s32.totalorder %v182, 111
        %v1272 = vsel %vm1271, %v1268, %v1270
        %v1273 = vsel %vm1271, %v1270, %v1268
        %v1274 = vmul.f32 %v176, %v172
        %v1276 = vlaneseq
        %v1277 = vshrl.u32 %v1276, 7
        %v1278 = vsub.s32 0, %v1277
        %v1279 = vrot.slane %v1274, %v1278
        %v1280 = vlaneseq
        %v1281 = vshrl.u32 %v1280, 7
        %v1282 = vsub.s32 1, %v1281
        %v1283 = vrot.slane %v1274, %v1282
        %v1286 = vmul.f32 %v1272, %v1279
        %v1287 = vmul.f32 %v1273, %v1283
        %s1288 = scalar_lea.vmem %s2, 256
        %v1289 = vld [vmem:[%s1288] sm:$0xff]
        %v1290 = vld [vmem:[%s1288 + $0x8] sm:$0xff]
        %v1291 = vld [vmem:[%s1288 + $0x10] sm:$0xff]
        %v1292 = vld [vmem:[%s1288 + $0x18] sm:$0xff]
        %v1294 = vsel %vm229, %v1289, 0
        %v1297 = vsel %vm229, %v1290, 0
        %v1300 = vsel %vm229, %v1291, 0
        %v1303 = vsel %vm229, %v1292, 0
        %v1306 = vsel %vm242, %v1286, 0
        %v1309 = vsel %vm242, %v1287, 0
        %1311 = vmatprep.subr.mxu0 %v1309
        %1312 = vmatpush1.msra.mxu0 %v1306
        %1313 = vmatprep.subr.mxu0 0.0
        %1314 = vmatpush1.msra.mxu0 0.0
        %1315 = vmatprep.subr.mxu0 0.0
        %1316 = vmatpush1.msra.mxu0 0.0
        %1317 = vmatprep.subr.mxu0 0.0
        %1318 = vmatpush1.msra.mxu0 0.0
        %1319 = vmatprep.subr.mxu0 0.0
        %1320 = vmatpush1.msra.mxu0 0.0
        %1321 = vmatprep.subr.mxu0 0.0
        %1322 = vmatpush1.msra.mxu0 0.0
        %1323 = vmatprep.subr.mxu0 0.0
        %1324 = vmatpush1.msra.mxu0 0.0
        %1325 = vmatprep.subr.mxu0 0.0
        %1326 = vmatpush1.msra.mxu0 0.0
        %1327 = vmatprep.subr.mxu0 0.0
        %1328 = vmatpush1.msra.mxu0 0.0
        %1329 = vmatprep.subr.mxu0 0.0
        %1330 = vmatpush1.msra.mxu0 0.0
        %1331 = vmatprep.subr.mxu0 0.0
        %1332 = vmatpush1.msra.mxu0 0.0
        %1333 = vmatprep.subr.mxu0 0.0
        %1334 = vmatpush1.msra.mxu0 0.0
        %1335 = vmatprep.subr.mxu0 0.0
        %1336 = vmatpush1.msra.mxu0 0.0
        %1337 = vmatprep.subr.mxu0 0.0
        %1338 = vmatpush1.msra.mxu0 0.0
        %1339 = vmatprep.subr.mxu0 0.0
        %1340 = vmatpush1.msra.mxu0 0.0
        %1341 = vmatprep.subr.mxu0 0.0
        %1342 = vmatpush1.msra.mxu0 0.0
        %1343 = vmatprep.subr.mxu0 0.0
        %1344 = vmatpush1.msra.mxu0 0.0
        %1345 = vmatprep.subr.mxu0 0.0
        %1346 = vmatpush1.msra.mxu0 0.0
        %1347 = vmatprep.subr.mxu0 0.0
        %1348 = vmatpush1.msra.mxu0 0.0
        %1349 = vmatprep.subr.mxu0 0.0
        %1350 = vmatpush1.msra.mxu0 0.0
        %1351 = vmatprep.subr.mxu0 0.0
        %1352 = vmatpush1.msra.mxu0 0.0
        %1353 = vmatprep.subr.mxu0 0.0
        %1354 = vmatpush1.msra.mxu0 0.0
        %1355 = vmatprep.subr.mxu0 0.0
        %1356 = vmatpush1.msra.mxu0 0.0
        %1357 = vmatprep.subr.mxu0 0.0
        %1358 = vmatpush1.msra.mxu0 0.0
        %1359 = vmatprep.subr.mxu0 0.0
        %1360 = vmatpush1.msra.mxu0 0.0
        %1361 = vmatprep.subr.mxu0 0.0
        %1362 = vmatpush1.msra.mxu0 0.0
        %1363 = vmatprep.subr.mxu0 0.0
        %1364 = vmatpush1.msra.mxu0 0.0
        %1365 = vmatprep.subr.mxu0 0.0
        %1366 = vmatpush1.msra.mxu0 0.0
        %1367 = vmatprep.subr.mxu0 0.0
        %1368 = vmatpush1.msra.mxu0 0.0
        %1369 = vmatprep.subr.mxu0 0.0
        %1370 = vmatpush1.msra.mxu0 0.0
        %1371 = vmatprep.subr.mxu0 0.0
        %1372 = vmatpush1.msra.mxu0 0.0
        %1373 = vmatprep.subr.mxu0 0.0
        %1374 = vmatpush1.msra.mxu0 0.0
        %1375 = vmatprep.mubr.f32.mxu0 0.0
        %1376 = vmatmul.mubr.f32.gmra.mrb[0].mxu0 %v1294
        %v1377 = vpop.f32.mrb[0].mxu0
        %v1378 = vadd.f32 0.0, %v1377
        %v1379 = vpop.f32.mrb[0].mxu0
        %v1380 = vadd.f32 0.0, %v1379
        %1381 = vmatprep.mubr.f32.mxu0 0.0
        %1382 = vmatmul.mubr.f32.gmra.mrb[0].mxu0 %v1297
        %v1383 = vpop.f32.mrb[0].mxu0
        %v1384 = vadd.f32 0.0, %v1383
        %v1385 = vpop.f32.mrb[0].mxu0
        %v1386 = vadd.f32 0.0, %v1385
        %1387 = vmatprep.mubr.f32.mxu0 0.0
        %1388 = vmatmul.mubr.f32.gmra.mrb[0].mxu0 %v1300
        %v1389 = vpop.f32.mrb[0].mxu0
        %v1390 = vadd.f32 0.0, %v1389
        %v1391 = vpop.f32.mrb[0].mxu0
        %v1392 = vadd.f32 0.0, %v1391
        %1393 = vmatprep.mubr.f32.mxu0 0.0
        %1394 = vmatmul.mubr.f32.gmra.mrb[0].mxu0 %v1303
        %v1395 = vpop.f32.mrb[0].mxu0
        %v1396 = vadd.f32 0.0, %v1395
        %v1397 = vpop.f32.mrb[0].mxu0
        %v1398 = vadd.f32 0.0, %v1397
        %1399 = vdwg.mxu0
        %v1400 = vadd.f32 %v1259, %v1378
        %v1401 = vadd.f32 %v1260, %v1380
        %v1402 = vadd.f32 %v1261, %v1384
        %v1403 = vadd.f32 %v1262, %v1386
        %v1404 = vadd.f32 %v1263, %v1390
        %v1405 = vadd.f32 %v1264, %v1392
        %v1406 = vadd.f32 %v1265, %v1396
        %v1407 = vadd.f32 %v1266, %v1398
        %1408 = vst [vmem:[%s160] sm:$0xff] %v1400
        %1409 = vst [vmem:[%s160 + $0x8] sm:$0xff] %v1401
        %1410 = vst [vmem:[%s160 + $0x10] sm:$0xff] %v1402
        %1411 = vst [vmem:[%s160 + $0x18] sm:$0xff] %v1403
        %1412 = vst [vmem:[%s160 + $0x20] sm:$0xff] %v1404
        %1413 = vst [vmem:[%s160 + $0x28] sm:$0xff] %v1405
        %1414 = vst [vmem:[%s160 + $0x30] sm:$0xff] %v1406
        %1415 = vst [vmem:[%s160 + $0x38] sm:$0xff] %v1407
        %s1416 = sand.u32 %s90, 1
        %s1417 = sand.u32 %s90, 1
        %s1418 = smul.addr %s1417, 64
        %s1419 = scalar_lea.vmem [#allocation2], %s1418
        // Predicated region
        $region33: #{small_bais_conv_forward.1} parent=31 // pred_check
          %p1420 = pneg %p100
        $region34: #{small_bais_conv_forward.1} parent=31 // pred_check_branch
          %1422 = sbr.rel (%p1420) target = $region36
        $region35: #{small_bais_conv_forward.1} parent=31 // pred_region
          %s1423 = smul.u32 2, %s14
          %s1424 = smul.addr %s1423, 8
          %s1425 = scalar_lea.vmem %s3, %s1424
          // Predicated region
          $region37: #{small_bais_conv_forward.1} parent=35 // pred_check
            _
          $region38: #{small_bais_conv_forward.1} parent=35 // pred_check_branch
            %1427 = sbr.rel (0) target = $region40
          $region39: #{small_bais_conv_forward.1} parent=35 // pred_region
            // Predicated region
            $region41: #{small_bais_conv_forward.1} parent=39 // pred_check
              _
            $region42: #{small_bais_conv_forward.1} parent=39 // pred_check_branch
              %1429 = sbr.rel (0) target = $region44
            $region43: #{small_bais_conv_forward.1} parent=39 // pred_region
              loop: start=0, step=1, limit=1
              $region45: #{small_bais_conv_forward.1} parent=43 // loop_pre_header
                _
              $region46: #{small_bais_conv_forward.1} parent=43 // loop_header
                %s1431 = sphi 0, %s1435
                %p1432 = scmp.ge.s32.totalorder %s1431, 1
                %s1436 = sphi %s1419, %s1419
                %s1437 = sphi %s1425, %s1425
              $region47: #{small_bais_conv_forward.1} parent=43 // loop_header_branch
                %1434 = sbr.rel (%p1432) target = $region51
              $region48: #{small_bais_conv_forward.1} parent=43 // loop_body
                %v1438 = vld [vmem:[%s1436] sm:$0xff]
                %1439 = vst [vmem:[%s1437] sm:$0xff] %v1438
                %v1440 = vld [vmem:[%s1436 + $0x8] sm:$0xff]
                %1441 = vst [vmem:[%s1437 + $0x8] sm:$0xff] %v1440
                %v1442 = vld [vmem:[%s1436 + $0x10] sm:$0xff]
                %1443 = vst [vmem:[%s1437 + $0x20] sm:$0xff] %v1442
                %v1444 = vld [vmem:[%s1436 + $0x18] sm:$0xff]
                %1445 = vst [vmem:[%s1437 + $0x28] sm:$0xff] %v1444
                %v1446 = vld [vmem:[%s1436 + $0x20] sm:$0xff]
                %1447 = vst [vmem:[%s1437 + $0x40] sm:$0xff] %v1446
                %v1448 = vld [vmem:[%s1436 + $0x28] sm:$0xff]
                %1449 = vst [vmem:[%s1437 + $0x48] sm:$0xff] %v1448
                %v1450 = vld [vmem:[%s1436 + $0x30] sm:$0xff]
                %1451 = vst [vmem:[%s1437 + $0x60] sm:$0xff] %v1450
                %v1452 = vld [vmem:[%s1436 + $0x38] sm:$0xff]
                %1453 = vst [vmem:[%s1437 + $0x68] sm:$0xff] %v1452
              $region49: #{small_bais_conv_forward.1} parent=43 // loop_footer
                %s1435 = sadd.s32 1, %s1431
              $region50: #{small_bais_conv_forward.1} parent=43 // loop_footer_branch
                %1430 = sbr.rel target = $region46
              $region51: #{small_bais_conv_forward.1} parent=43 // loop_exit
                _
            $region44: #{small_bais_conv_forward.1} parent=39 // pred_fallthru
              _
            // Predicated region
            $region52: #{small_bais_conv_forward.1} parent=39 // pred_check
              _
            $region53: #{small_bais_conv_forward.1} parent=39 // pred_check_branch
              %1455 = sbr.rel target = $region55
            $region54: #{small_bais_conv_forward.1} parent=39 // pred_region
              _
            $region55: #{small_bais_conv_forward.1} parent=39 // pred_fallthru
              _
          $region40: #{small_bais_conv_forward.1} parent=35 // pred_fallthru
            _
          %1456 = vnop
        $region36: #{small_bais_conv_forward.1} parent=31 // pred_fallthru
          _
      $region32: #{small_bais_conv_forward.1} parent=5 // pred_fallthru
        _
      %p1457 = scmp.le.s32.totalorder 2, %s9
      // Predicated region
      $region56: #{small_bais_conv_forward.1} parent=5 // pred_check
        %p1458 = pneg %p1457
      $region57: #{small_bais_conv_forward.1} parent=5 // pred_check_branch
        %1460 = sbr.rel (%p1458) target = $region59
      $region58: #{small_bais_conv_forward.1} parent=5 // pred_region
        %s1461 = ssub.s32 %s9, 2
        // Predicated region
        $region60: #{small_bais_conv_forward.1} parent=58 // pred_check
          %p1462 = pneg %p106
        $region61: #{small_bais_conv_forward.1} parent=58 // pred_check_branch
          %1464 = sbr.rel (%p1462) target = $region63
        $region62: #{small_bais_conv_forward.1} parent=58 // pred_region
          %s1465 = sand.u32 %s91, 1
          %s1466 = sand.u32 %s91, 1
          %s1467 = smul.addr %s1466, 64
          %s1468 = scalar_lea.vmem [#allocation2], %s1467
        $region63: #{small_bais_conv_forward.1} parent=58 // pred_fallthru
          _
      $region59: #{small_bais_conv_forward.1} parent=5 // pred_fallthru
        _
    $region6: #{small_bais_conv_forward.1} parent=1 // loop_footer
      %s13 = sadd.s32 1, %s9
    $region7: #{small_bais_conv_forward.1} parent=1 // loop_footer_branch
      %8 = sbr.rel target = $region3
    $region8: #{small_bais_conv_forward.1} parent=1 // loop_exit
      _

</llo_original>
